<compile_context>
chip_gen: v7x
topology: tpu7x:2x2x1
jax: 0.10.0
libtpu: 0.0.40
codegen_flags: <defaults>
</compile_context>

<pallas_src>
import functools
import math

import jax
import jax.numpy as jnp
from jax import lax
from jax.experimental import pallas as pl
from jax.experimental.pallas import tpu as pltpu


def _bert_attention_kernel(x_ref, mask_ref,
                           wqkv_ref, bqkv_ref, wo_ref, bo_ref,
                           gamma_ref, beta_ref,
                           o_ref, ctx_ref, *, num_heads, head_size, ln_eps):
    # x_ref: [1, S, H]  mask_ref: [1, 1, S]  wqkv: [H, 3H] bf16  wo: [H, H] bf16
    # bqkv: [1, 3H] f32  bo/gamma/beta: [1, H] f32  ctx_ref: [S, H] bf16 scratch
    hid = num_heads * head_size

    x_f32 = x_ref[0].astype(jnp.float32)        # [S, H] residual / LayerNorm math in f32
    x_bf = x_f32.astype(jnp.bfloat16)           # bf16 MXU operand
    mask = mask_ref[0].astype(jnp.float32)      # [1, S] additive key-padding mask

    # Fused QKV projection (single bf16 matmul, f32 accumulation).
    # 1/sqrt(Dh) is already folded into wq/bq by the wrapper, so q is pre-scaled.
    qkv = jnp.dot(x_bf, wqkv_ref[...], preferred_element_type=jnp.float32) + bqkv_ref[...]
    q = qkv[:, :hid].astype(jnp.bfloat16)
    k = qkv[:, hid:2 * hid].astype(jnp.bfloat16)
    v = qkv[:, 2 * hid:].astype(jnp.bfloat16)

    # Per-head attention; each head's context is written into the ctx scratch so the
    # output projection can run as ONE full-contraction matmul afterwards.
    for h in range(num_heads):
        sl = slice(h * head_size, (h + 1) * head_size)
        qh, kh, vh = q[:, sl], k[:, sl], v[:, sl]                        # [S, Dh] bf16
        # q @ k^T without materializing an XLU transpose (contract last dims).
        scores = lax.dot_general(qh, kh, (((1,), (1,)), ((), ())),
                                 preferred_element_type=jnp.float32)     # [S, S] f32
        scores = scores + mask
        scores = scores - jnp.max(scores, axis=-1, keepdims=True)        # stable softmax
        p = jnp.exp(scores)
        inv = pl.reciprocal(jnp.sum(p, axis=-1, keepdims=True), approx=True)
        p = (p * inv).astype(jnp.bfloat16)
        ctx_ref[:, sl] = jnp.dot(p, vh,
                                 preferred_element_type=jnp.float32).astype(jnp.bfloat16)

    # Single K=H output projection, then BertSelfOutput: bias + residual + LayerNorm.
    out = jnp.dot(ctx_ref[...], wo_ref[...], preferred_element_type=jnp.float32)
    out = out + bo_ref[...] + x_f32
    u = jnp.mean(out, axis=-1, keepdims=True)
    d = out - u
    var = jnp.mean(d * d, axis=-1, keepdims=True)
    y = gamma_ref[...] * (d * lax.rsqrt(var + ln_eps)) + beta_ref[...]
    o_ref[0] = y.astype(o_ref.dtype)


def bert_attention(hidden_states, attention_mask, params, *, num_heads, ln_eps=1e-12):
    """hidden_states: [B, S, H]; attention_mask: [B, 1, 1, S] additive mask -> [B, S, H]."""
    B, S, H = hidden_states.shape
    assert H % num_heads == 0
    head_size = H // num_heads
    # Key-padding mask broadcast over queries only (standard BertAttention usage).
    assert attention_mask.shape == (B, 1, 1, S), attention_mask.shape

    scale = 1.0 / math.sqrt(head_size)
    f32 = lambda a: a.astype(jnp.float32)

    # Pack QKV weights/biases; fold the softmax scale into the Q projection; cast the
    # big matrices to bf16 (halves resident VMEM, runs the MXU at its bf16 rate).
    wqkv = jnp.concatenate(
        [f32(params["wq"]) * scale, f32(params["wk"]), f32(params["wv"])],
        axis=1).astype(jnp.bfloat16)                                   # [H, 3H] bf16
    bqkv = jnp.concatenate(
        [f32(params["bq"]) * scale, f32(params["bk"]), f32(params["bv"])]
    ).reshape(1, 3 * H)                                                # [1, 3H] f32
    wo = params["wo"].astype(jnp.bfloat16)                             # [H, H] bf16
    bo = f32(params["bo"]).reshape(1, H)
    gamma = f32(params["gamma"]).reshape(1, H)
    beta = f32(params["beta"]).reshape(1, H)

    mask3 = attention_mask.reshape(B, 1, S).astype(jnp.float32)        # drop broadcast dims

    kernel = functools.partial(_bert_attention_kernel, num_heads=num_heads,
                               head_size=head_size, ln_eps=ln_eps)

    per_batch = lambda b: (b, 0, 0)          # activations / mask / output: tile over batch

    def resident(shape):
        # Constant index_map -> same block every grid step (stays in VMEM, no re-DMA);
        # Buffered(1) collapses the default double-buffer for these resident params.
        return pl.BlockSpec(shape, lambda b: (0,) * len(shape),
                            pipeline_mode=pl.Buffered(1))

    # Advisory cost estimate so XLA schedules neighbouring ops around this call.
    flops = 2 * B * S * H * (4 * H + 2 * S)
    transcendentals = B * num_heads * S * S + B * num_heads * S + B * S
    bytes_accessed = 4 * (2 * B * S * H + B * S) + 2 * (4 * H * H) + 4 * (6 * H)

    return pl.pallas_call(
        kernel,
        out_shape=jax.ShapeDtypeStruct((B, S, H), hidden_states.dtype),
        grid_spec=pltpu.PrefetchScalarGridSpec(
            num_scalar_prefetch=0,
            grid=(B,),
            in_specs=[
                pl.BlockSpec((1, S, H), per_batch),   # hidden_states
                pl.BlockSpec((1, 1, S), per_batch),   # attention mask
                resident((H, 3 * H)),                 # wqkv (bf16)
                resident((1, 3 * H)),                 # bqkv
                resident((H, H)),                     # wo (bf16)
                resident((1, H)),                     # bo
                resident((1, H)),                     # gamma
                resident((1, H)),                     # beta
            ],
            out_specs=pl.BlockSpec((1, S, H), per_batch),
            scratch_shapes=[pltpu.VMEM((S, H), jnp.bfloat16)],   # per-head context slab
        ),
        compiler_params=pltpu.CompilerParams(
            dimension_semantics=("parallel",),
            vmem_limit_bytes=64 * 1024 * 1024),
        cost_estimate=pl.CostEstimate(
            flops=flops, transcendentals=transcendentals,
            bytes_accessed=bytes_accessed),
    )(hidden_states, mask3, wqkv, bqkv, wo, bo, gamma, beta)


if __name__ == "__main__":
    B, S, H, NH = 2, 8, 32, 4
    Dh = H // NH

    key = jax.random.PRNGKey(0)
    keys = jax.random.split(key, 12)

    hidden_states = jax.random.normal(keys[0], (B, S, H), dtype=jnp.float32)

    # Additive attention mask [B, 1, 1, S]: pad out the last 2 keys of batch 1.
    pad = jnp.zeros((B, S), dtype=jnp.float32).at[1, S - 2:].set(1.0)
    attention_mask = (pad * -10000.0).reshape(B, 1, 1, S)

    def make_linear(kw, kb):
        w = jax.random.normal(kw, (H, H), dtype=jnp.float32) * 0.02   # [in, out]
        b = jax.random.normal(kb, (H,), dtype=jnp.float32) * 0.02
        return w, b

    wq, bq = make_linear(keys[1], keys[2])
    wk, bk = make_linear(keys[3], keys[4])
    wv, bv = make_linear(keys[5], keys[6])
    wo, bo = make_linear(keys[7], keys[8])
    gamma = jnp.ones((H,), jnp.float32) + 0.1 * jax.random.normal(keys[9], (H,), jnp.float32)
    beta = 0.1 * jax.random.normal(keys[10], (H,), jnp.float32)

    params = dict(wq=wq, bq=bq, wk=wk, bk=bk, wv=wv, bv=bv,
                  wo=wo, bo=bo, gamma=gamma, beta=beta)

    out = bert_attention(hidden_states, attention_mask, params, num_heads=NH)
    jax.block_until_ready(out)

    # Pure-JAX f32 reference (mirrors the PyTorch module; dropout in eval mode).
    def reference(x, mask4):
        q = x @ wq + bq
        k = x @ wk + bk
        v = x @ wv + bv
        split = lambda a: a.reshape(B, S, NH, Dh).transpose(0, 2, 1, 3)   # [B, NH, S, Dh]
        qh, kh, vh = split(q), split(k), split(v)
        scores = jnp.einsum("bhqd,bhkd->bhqk", qh, kh) / math.sqrt(Dh) + mask4
        probs = jax.nn.softmax(scores, axis=-1)
        ctx = jnp.einsum("bhqk,bhkd->bhqd", probs, vh)
        ctx = ctx.transpose(0, 2, 1, 3).reshape(B, S, H)
        y = ctx @ wo + bo + x
        u = y.mean(-1, keepdims=True)
        s = ((y - u) ** 2).mean(-1, keepdims=True)
        return gamma * ((y - u) / jnp.sqrt(s + 1e-12)) + beta

    expected = reference(hidden_states, attention_mask)
    assert out.shape == (B, S, H)
    # bf16 matmul inputs + approx reciprocal -> loosened (but still tight) tolerance.
    assert jnp.allclose(out, expected, atol=2e-2, rtol=2e-2), \
        f"max abs err = {float(jnp.max(jnp.abs(out - expected)))}"

    print("KERNEL_OK")
</pallas_src>

<mosaic_0001>
module attributes {stable_mosaic.version = 11 : i64} {
  func.func @_bert_attention_kernel(%arg0: i32, %arg1: memref<1x8x32xf32, #tpu.memory_space<vmem>>, %arg2: memref<1x1x8xf32, #tpu.memory_space<vmem>>, %arg3: memref<32x96xbf16, #tpu.memory_space<vmem>>, %arg4: memref<1x96xf32, #tpu.memory_space<vmem>>, %arg5: memref<32x32xbf16, #tpu.memory_space<vmem>>, %arg6: memref<1x32xf32, #tpu.memory_space<vmem>>, %arg7: memref<1x32xf32, #tpu.memory_space<vmem>>, %arg8: memref<1x32xf32, #tpu.memory_space<vmem>>, %arg9: memref<1x8x32xf32, #tpu.memory_space<vmem>>, %arg10: memref<8x32xbf16, #tpu.memory_space<vmem>>) attributes {dimension_semantics = [#tpu.dimension_semantics<parallel>], iteration_bounds = array<i64: 2>, scalar_prefetch = 0 : i64, scratch_operands = 1 : i64, tpu.core_type = #tpu.core_type<tc>, window_params = [{transform_indices = @transform_0, window_bounds = array<i64: 1, 8, 32>}, {transform_indices = @transform_1, window_bounds = array<i64: 1, 1, 8>}, {pipeline_mode = #tpu.pipeline_mode<synchronous>, transform_indices = @transform_2, window_bounds = array<i64: 32, 96>}, {pipeline_mode = #tpu.pipeline_mode<synchronous>, transform_indices = @transform_3, window_bounds = array<i64: 1, 96>}, {pipeline_mode = #tpu.pipeline_mode<synchronous>, transform_indices = @transform_4, window_bounds = array<i64: 32, 32>}, {pipeline_mode = #tpu.pipeline_mode<synchronous>, transform_indices = @transform_5, window_bounds = array<i64: 1, 32>}, {pipeline_mode = #tpu.pipeline_mode<synchronous>, transform_indices = @transform_6, window_bounds = array<i64: 1, 32>}, {pipeline_mode = #tpu.pipeline_mode<synchronous>, transform_indices = @transform_7, window_bounds = array<i64: 1, 32>}, {transform_indices = @transform_8, window_bounds = array<i64: 1, 8, 32>}]} {
    %c0 = arith.constant 0 : index
    %c0_0 = arith.constant 0 : index
    %c0_1 = arith.constant 0 : index
    %0 = vector.load %arg1[%c0, %c0_0, %c0_1] : memref<1x8x32xf32, #tpu.memory_space<vmem>>, vector<1x8x32xf32>
    %1 = vector.shape_cast %0 : vector<1x8x32xf32> to vector<8x32xf32>
    %2 = arith.truncf %1 : vector<8x32xf32> to vector<8x32xbf16>
    %c0_2 = arith.constant 0 : index
    %c0_3 = arith.constant 0 : index
    %c0_4 = arith.constant 0 : index
    %3 = vector.load %arg2[%c0_2, %c0_3, %c0_4] : memref<1x1x8xf32, #tpu.memory_space<vmem>>, vector<1x1x8xf32>
    %4 = vector.shape_cast %3 : vector<1x1x8xf32> to vector<1x8xf32>
    %c0_5 = arith.constant 0 : index
    %c0_6 = arith.constant 0 : index
    %5 = vector.load %arg3[%c0_5, %c0_6] : memref<32x96xbf16, #tpu.memory_space<vmem>>, vector<32x96xbf16>
    %cst = arith.constant dense<0.000000e+00> : vector<8x96xf32>
    %6 = tpu.matmul %2, %5, %cst {dimension_numbers = #tpu.dot_dimension_numbers<[1], [0], [0], [1], [0, 0, 1, 1], [], []>} : vector<8x32xbf16>, vector<32x96xbf16>, vector<8x96xf32> -> vector<8x96xf32>
    %c0_7 = arith.constant 0 : index
    %c0_8 = arith.constant 0 : index
    %7 = vector.load %arg4[%c0_7, %c0_8] : memref<1x96xf32, #tpu.memory_space<vmem>>, vector<1x96xf32>
    %8 = vector.broadcast %7 : vector<1x96xf32> to vector<8x96xf32>
    %9 = arith.addf %6, %8 : vector<8x96xf32>
    %10 = vector.extract_strided_slice %9 {offsets = [0, 0], sizes = [8, 32], strides = [1, 1]} : vector<8x96xf32> to vector<8x32xf32>
    %11 = arith.truncf %10 : vector<8x32xf32> to vector<8x32xbf16>
    %12 = vector.extract_strided_slice %9 {offsets = [0, 32], sizes = [8, 32], strides = [1, 1]} : vector<8x96xf32> to vector<8x32xf32>
    %13 = arith.truncf %12 : vector<8x32xf32> to vector<8x32xbf16>
    %14 = vector.extract_strided_slice %9 {offsets = [0, 64], sizes = [8, 32], strides = [1, 1]} : vector<8x96xf32> to vector<8x32xf32>
    %15 = arith.truncf %14 : vector<8x32xf32> to vector<8x32xbf16>
    %16 = vector.extract_strided_slice %11 {offsets = [0, 0], sizes = [8, 8], strides = [1, 1]} : vector<8x32xbf16> to vector<8x8xbf16>
    %17 = vector.extract_strided_slice %13 {offsets = [0, 0], sizes = [8, 8], strides = [1, 1]} : vector<8x32xbf16> to vector<8x8xbf16>
    %18 = vector.extract_strided_slice %15 {offsets = [0, 0], sizes = [8, 8], strides = [1, 1]} : vector<8x32xbf16> to vector<8x8xbf16>
    %cst_9 = arith.constant dense<0.000000e+00> : vector<8x8xf32>
    %19 = tpu.matmul %16, %17, %cst_9 {dimension_numbers = #tpu.dot_dimension_numbers<[1], [1], [0], [0], [0, 0, 1, 0], [], []>} : vector<8x8xbf16>, vector<8x8xbf16>, vector<8x8xf32> -> vector<8x8xf32>
    %20 = vector.broadcast %4 : vector<1x8xf32> to vector<8x8xf32>
    %21 = arith.addf %19, %20 : vector<8x8xf32>
    %cst_10 = arith.constant dense<0xFF800000> : vector<8xf32>
    %22 = vector.multi_reduction <maximumf>, %21, %cst_10 [1] : vector<8x8xf32> to vector<8xf32>
    %23 = vector.shape_cast %22 : vector<8xf32> to vector<8x1xf32>
    %24 = vector.broadcast %23 : vector<8x1xf32> to vector<8x8xf32>
    %25 = arith.subf %21, %24 : vector<8x8xf32>
    %26 = math.exp %25 : vector<8x8xf32>
    %cst_11 = arith.constant dense<0.000000e+00> : vector<8xf32>
    %27 = vector.multi_reduction <add>, %26, %cst_11 [1] : vector<8x8xf32> to vector<8xf32>
    %28 = vector.shape_cast %27 : vector<8xf32> to vector<8x1xf32>
    %29 = tpu.reciprocal %28 {approx = true} : vector<8x1xf32> -> vector<8x1xf32>
    %30 = vector.broadcast %29 : vector<8x1xf32> to vector<8x8xf32>
    %31 = arith.mulf %26, %30 : vector<8x8xf32>
    %32 = arith.truncf %31 : vector<8x8xf32> to vector<8x8xbf16>
    %cst_12 = arith.constant dense<0.000000e+00> : vector<8x8xf32>
    %33 = tpu.matmul %32, %18, %cst_12 {dimension_numbers = #tpu.dot_dimension_numbers<[1], [0], [0], [1], [0, 0, 1, 1], [], []>} : vector<8x8xbf16>, vector<8x8xbf16>, vector<8x8xf32> -> vector<8x8xf32>
    %34 = arith.truncf %33 : vector<8x8xf32> to vector<8x8xbf16>
    %c0_13 = arith.constant 0 : index
    %c0_14 = arith.constant 0 : index
    %35 = vector.load %arg10[%c0_13, %c0_14] : memref<8x32xbf16, #tpu.memory_space<vmem>>, vector<8x8xbf16>
    tpu.vector_store %arg10[%c0_13, %c0_14], %34 {strides = array<i32>} : memref<8x32xbf16, #tpu.memory_space<vmem>>, vector<8x8xbf16>,
    %36 = vector.extract_strided_slice %11 {offsets = [0, 8], sizes = [8, 8], strides = [1, 1]} : vector<8x32xbf16> to vector<8x8xbf16>
    %37 = vector.extract_strided_slice %13 {offsets = [0, 8], sizes = [8, 8], strides = [1, 1]} : vector<8x32xbf16> to vector<8x8xbf16>
    %38 = vector.extract_strided_slice %15 {offsets = [0, 8], sizes = [8, 8], strides = [1, 1]} : vector<8x32xbf16> to vector<8x8xbf16>
    %cst_15 = arith.constant dense<0.000000e+00> : vector<8x8xf32>
    %39 = tpu.matmul %36, %37, %cst_15 {dimension_numbers = #tpu.dot_dimension_numbers<[1], [1], [0], [0], [0, 0, 1, 0], [], []>} : vector<8x8xbf16>, vector<8x8xbf16>, vector<8x8xf32> -> vector<8x8xf32>
    %40 = vector.broadcast %4 : vector<1x8xf32> to vector<8x8xf32>
    %41 = arith.addf %39, %40 : vector<8x8xf32>
    %cst_16 = arith.constant dense<0xFF800000> : vector<8xf32>
    %42 = vector.multi_reduction <maximumf>, %41, %cst_16 [1] : vector<8x8xf32> to vector<8xf32>
    %43 = vector.shape_cast %42 : vector<8xf32> to vector<8x1xf32>
    %44 = vector.broadcast %43 : vector<8x1xf32> to vector<8x8xf32>
    %45 = arith.subf %41, %44 : vector<8x8xf32>
    %46 = math.exp %45 : vector<8x8xf32>
    %cst_17 = arith.constant dense<0.000000e+00> : vector<8xf32>
    %47 = vector.multi_reduction <add>, %46, %cst_17 [1] : vector<8x8xf32> to vector<8xf32>
    %48 = vector.shape_cast %47 : vector<8xf32> to vector<8x1xf32>
    %49 = tpu.reciprocal %48 {approx = true} : vector<8x1xf32> -> vector<8x1xf32>
    %50 = vector.broadcast %49 : vector<8x1xf32> to vector<8x8xf32>
    %51 = arith.mulf %46, %50 : vector<8x8xf32>
    %52 = arith.truncf %51 : vector<8x8xf32> to vector<8x8xbf16>
    %cst_18 = arith.constant dense<0.000000e+00> : vector<8x8xf32>
    %53 = tpu.matmul %52, %38, %cst_18 {dimension_numbers = #tpu.dot_dimension_numbers<[1], [0], [0], [1], [0, 0, 1, 1], [], []>} : vector<8x8xbf16>, vector<8x8xbf16>, vector<8x8xf32> -> vector<8x8xf32>
    %54 = arith.truncf %53 : vector<8x8xf32> to vector<8x8xbf16>
    %c0_19 = arith.constant 0 : index
    %c8 = arith.constant 8 : index
    %55 = vector.load %arg10[%c0_19, %c8] : memref<8x32xbf16, #tpu.memory_space<vmem>>, vector<8x8xbf16>
    tpu.vector_store %arg10[%c0_19, %c8], %54 {strides = array<i32>} : memref<8x32xbf16, #tpu.memory_space<vmem>>, vector<8x8xbf16>,
    %56 = vector.extract_strided_slice %11 {offsets = [0, 16], sizes = [8, 8], strides = [1, 1]} : vector<8x32xbf16> to vector<8x8xbf16>
    %57 = vector.extract_strided_slice %13 {offsets = [0, 16], sizes = [8, 8], strides = [1, 1]} : vector<8x32xbf16> to vector<8x8xbf16>
    %58 = vector.extract_strided_slice %15 {offsets = [0, 16], sizes = [8, 8], strides = [1, 1]} : vector<8x32xbf16> to vector<8x8xbf16>
    %cst_20 = arith.constant dense<0.000000e+00> : vector<8x8xf32>
    %59 = tpu.matmul %56, %57, %cst_20 {dimension_numbers = #tpu.dot_dimension_numbers<[1], [1], [0], [0], [0, 0, 1, 0], [], []>} : vector<8x8xbf16>, vector<8x8xbf16>, vector<8x8xf32> -> vector<8x8xf32>
    %60 = vector.broadcast %4 : vector<1x8xf32> to vector<8x8xf32>
    %61 = arith.addf %59, %60 : vector<8x8xf32>
    %cst_21 = arith.constant dense<0xFF800000> : vector<8xf32>
    %62 = vector.multi_reduction <maximumf>, %61, %cst_21 [1] : vector<8x8xf32> to vector<8xf32>
    %63 = vector.shape_cast %62 : vector<8xf32> to vector<8x1xf32>
    %64 = vector.broadcast %63 : vector<8x1xf32> to vector<8x8xf32>
    %65 = arith.subf %61, %64 : vector<8x8xf32>
    %66 = math.exp %65 : vector<8x8xf32>
    %cst_22 = arith.constant dense<0.000000e+00> : vector<8xf32>
    %67 = vector.multi_reduction <add>, %66, %cst_22 [1] : vector<8x8xf32> to vector<8xf32>
    %68 = vector.shape_cast %67 : vector<8xf32> to vector<8x1xf32>
    %69 = tpu.reciprocal %68 {approx = true} : vector<8x1xf32> -> vector<8x1xf32>
    %70 = vector.broadcast %69 : vector<8x1xf32> to vector<8x8xf32>
    %71 = arith.mulf %66, %70 : vector<8x8xf32>
    %72 = arith.truncf %71 : vector<8x8xf32> to vector<8x8xbf16>
    %cst_23 = arith.constant dense<0.000000e+00> : vector<8x8xf32>
    %73 = tpu.matmul %72, %58, %cst_23 {dimension_numbers = #tpu.dot_dimension_numbers<[1], [0], [0], [1], [0, 0, 1, 1], [], []>} : vector<8x8xbf16>, vector<8x8xbf16>, vector<8x8xf32> -> vector<8x8xf32>
    %74 = arith.truncf %73 : vector<8x8xf32> to vector<8x8xbf16>
    %c0_24 = arith.constant 0 : index
    %c16 = arith.constant 16 : index
    %75 = vector.load %arg10[%c0_24, %c16] : memref<8x32xbf16, #tpu.memory_space<vmem>>, vector<8x8xbf16>
    tpu.vector_store %arg10[%c0_24, %c16], %74 {strides = array<i32>} : memref<8x32xbf16, #tpu.memory_space<vmem>>, vector<8x8xbf16>,
    %76 = vector.extract_strided_slice %11 {offsets = [0, 24], sizes = [8, 8], strides = [1, 1]} : vector<8x32xbf16> to vector<8x8xbf16>
    %77 = vector.extract_strided_slice %13 {offsets = [0, 24], sizes = [8, 8], strides = [1, 1]} : vector<8x32xbf16> to vector<8x8xbf16>
    %78 = vector.extract_strided_slice %15 {offsets = [0, 24], sizes = [8, 8], strides = [1, 1]} : vector<8x32xbf16> to vector<8x8xbf16>
    %cst_25 = arith.constant dense<0.000000e+00> : vector<8x8xf32>
    %79 = tpu.matmul %76, %77, %cst_25 {dimension_numbers = #tpu.dot_dimension_numbers<[1], [1], [0], [0], [0, 0, 1, 0], [], []>} : vector<8x8xbf16>, vector<8x8xbf16>, vector<8x8xf32> -> vector<8x8xf32>
    %80 = vector.broadcast %4 : vector<1x8xf32> to vector<8x8xf32>
    %81 = arith.addf %79, %80 : vector<8x8xf32>
    %cst_26 = arith.constant dense<0xFF800000> : vector<8xf32>
    %82 = vector.multi_reduction <maximumf>, %81, %cst_26 [1] : vector<8x8xf32> to vector<8xf32>
    %83 = vector.shape_cast %82 : vector<8xf32> to vector<8x1xf32>
    %84 = vector.broadcast %83 : vector<8x1xf32> to vector<8x8xf32>
    %85 = arith.subf %81, %84 : vector<8x8xf32>
    %86 = math.exp %85 : vector<8x8xf32>
    %cst_27 = arith.constant dense<0.000000e+00> : vector<8xf32>
    %87 = vector.multi_reduction <add>, %86, %cst_27 [1] : vector<8x8xf32> to vector<8xf32>
    %88 = vector.shape_cast %87 : vector<8xf32> to vector<8x1xf32>
    %89 = tpu.reciprocal %88 {approx = true} : vector<8x1xf32> -> vector<8x1xf32>
    %90 = vector.broadcast %89 : vector<8x1xf32> to vector<8x8xf32>
    %91 = arith.mulf %86, %90 : vector<8x8xf32>
    %92 = arith.truncf %91 : vector<8x8xf32> to vector<8x8xbf16>
    %cst_28 = arith.constant dense<0.000000e+00> : vector<8x8xf32>
    %93 = tpu.matmul %92, %78, %cst_28 {dimension_numbers = #tpu.dot_dimension_numbers<[1], [0], [0], [1], [0, 0, 1, 1], [], []>} : vector<8x8xbf16>, vector<8x8xbf16>, vector<8x8xf32> -> vector<8x8xf32>
    %94 = arith.truncf %93 : vector<8x8xf32> to vector<8x8xbf16>
    %c0_29 = arith.constant 0 : index
    %c24 = arith.constant 24 : index
    %95 = vector.load %arg10[%c0_29, %c24] : memref<8x32xbf16, #tpu.memory_space<vmem>>, vector<8x8xbf16>
    tpu.vector_store %arg10[%c0_29, %c24], %94 {strides = array<i32>} : memref<8x32xbf16, #tpu.memory_space<vmem>>, vector<8x8xbf16>,
    %c0_30 = arith.constant 0 : index
    %c0_31 = arith.constant 0 : index
    %96 = vector.load %arg10[%c0_30, %c0_31] : memref<8x32xbf16, #tpu.memory_space<vmem>>, vector<8x32xbf16>
    %c0_32 = arith.constant 0 : index
    %c0_33 = arith.constant 0 : index
    %97 = vector.load %arg5[%c0_32, %c0_33] : memref<32x32xbf16, #tpu.memory_space<vmem>>, vector<32x32xbf16>
    %cst_34 = arith.constant dense<0.000000e+00> : vector<8x32xf32>
    %98 = tpu.matmul %96, %97, %cst_34 {dimension_numbers = #tpu.dot_dimension_numbers<[1], [0], [0], [1], [0, 0, 1, 1], [], []>} : vector<8x32xbf16>, vector<32x32xbf16>, vector<8x32xf32> -> vector<8x32xf32>
    %c0_35 = arith.constant 0 : index
    %c0_36 = arith.constant 0 : index
    %99 = vector.load %arg6[%c0_35, %c0_36] : memref<1x32xf32, #tpu.memory_space<vmem>>, vector<1x32xf32>
    %100 = vector.broadcast %99 : vector<1x32xf32> to vector<8x32xf32>
    %101 = arith.addf %98, %100 : vector<8x32xf32>
    %102 = arith.addf %101, %1 : vector<8x32xf32>
    %cst_37 = arith.constant dense<0.000000e+00> : vector<8xf32>
    %103 = vector.multi_reduction <add>, %102, %cst_37 [1] : vector<8x32xf32> to vector<8xf32>
    %104 = vector.shape_cast %103 : vector<8xf32> to vector<8x1xf32>
    %cst_38 = arith.constant 3.200000e+01 : f32
    %105 = vector.broadcast %cst_38 : f32 to vector<8x1xf32>
    %106 = arith.divf %104, %105 : vector<8x1xf32>
    %107 = vector.broadcast %106 : vector<8x1xf32> to vector<8x32xf32>
    %108 = arith.subf %102, %107 : vector<8x32xf32>
    %109 = arith.mulf %108, %108 : vector<8x32xf32>
    %cst_39 = arith.constant dense<0.000000e+00> : vector<8xf32>
    %110 = vector.multi_reduction <add>, %109, %cst_39 [1] : vector<8x32xf32> to vector<8xf32>
    %111 = vector.shape_cast %110 : vector<8xf32> to vector<8x1xf32>
    %cst_40 = arith.constant 3.200000e+01 : f32
    %112 = vector.broadcast %cst_40 : f32 to vector<8x1xf32>
    %113 = arith.divf %111, %112 : vector<8x1xf32>
    %c0_41 = arith.constant 0 : index
    %c0_42 = arith.constant 0 : index
    %114 = vector.load %arg7[%c0_41, %c0_42] : memref<1x32xf32, #tpu.memory_space<vmem>>, vector<1x32xf32>
    %cst_43 = arith.constant 9.99999996E-13 : f32
    %115 = vector.broadcast %cst_43 : f32 to vector<8x1xf32>
    %116 = arith.addf %113, %115 : vector<8x1xf32>
    %117 = math.rsqrt %116 : vector<8x1xf32>
    %118 = vector.broadcast %117 : vector<8x1xf32> to vector<8x32xf32>
    %119 = arith.mulf %108, %118 : vector<8x32xf32>
    %120 = vector.broadcast %114 : vector<1x32xf32> to vector<8x32xf32>
    %121 = arith.mulf %120, %119 : vector<8x32xf32>
    %c0_44 = arith.constant 0 : index
    %c0_45 = arith.constant 0 : index
    %122 = vector.load %arg8[%c0_44, %c0_45] : memref<1x32xf32, #tpu.memory_space<vmem>>, vector<1x32xf32>
    %123 = vector.broadcast %122 : vector<1x32xf32> to vector<8x32xf32>
    %124 = arith.addf %121, %123 : vector<8x32xf32>
    %c0_46 = arith.constant 0 : index
    %c0_47 = arith.constant 0 : index
    %c0_48 = arith.constant 0 : index
    %125 = vector.load %arg9[%c0_46, %c0_47, %c0_48] : memref<1x8x32xf32, #tpu.memory_space<vmem>>, vector<1x8x32xf32>
    %126 = vector.shape_cast %125 : vector<1x8x32xf32> to vector<8x32xf32>
    %127 = vector.shape_cast %124 : vector<8x32xf32> to vector<1x8x32xf32>
    tpu.vector_store %arg9[%c0_46, %c0_47, %c0_48], %127 {strides = array<i32>} : memref<1x8x32xf32, #tpu.memory_space<vmem>>, vector<1x8x32xf32>,
    return
  }
  func.func @transform_0(%arg0: i32) -> (i32, i32, i32) {
    %c0_i32 = arith.constant 0 : i32
    %c0_i32_0 = arith.constant 0 : i32
    %c0_i32_1 = arith.constant 0 : i32
    return %arg0, %c0_i32, %c0_i32_0 : i32, i32, i32
  }
  func.func @transform_1(%arg0: i32) -> (i32, i32, i32) {
    %c0_i32 = arith.constant 0 : i32
    %c0_i32_0 = arith.constant 0 : i32
    %c0_i32_1 = arith.constant 0 : i32
    return %arg0, %c0_i32, %c0_i32_0 : i32, i32, i32
  }
  func.func @transform_2(%arg0: i32) -> (i32, i32) {
    %c0_i32 = arith.constant 0 : i32
    %c0_i32_0 = arith.constant 0 : i32
    %c0_i32_1 = arith.constant 0 : i32
    return %c0_i32, %c0_i32_0 : i32, i32
  }
  func.func @transform_3(%arg0: i32) -> (i32, i32) {
    %c0_i32 = arith.constant 0 : i32
    %c0_i32_0 = arith.constant 0 : i32
    %c0_i32_1 = arith.constant 0 : i32
    return %c0_i32, %c0_i32_0 : i32, i32
  }
  func.func @transform_4(%arg0: i32) -> (i32, i32) {
    %c0_i32 = arith.constant 0 : i32
    %c0_i32_0 = arith.constant 0 : i32
    %c0_i32_1 = arith.constant 0 : i32
    return %c0_i32, %c0_i32_0 : i32, i32
  }
  func.func @transform_5(%arg0: i32) -> (i32, i32) {
    %c0_i32 = arith.constant 0 : i32
    %c0_i32_0 = arith.constant 0 : i32
    %c0_i32_1 = arith.constant 0 : i32
    return %c0_i32, %c0_i32_0 : i32, i32
  }
  func.func @transform_6(%arg0: i32) -> (i32, i32) {
    %c0_i32 = arith.constant 0 : i32
    %c0_i32_0 = arith.constant 0 : i32
    %c0_i32_1 = arith.constant 0 : i32
    return %c0_i32, %c0_i32_0 : i32, i32
  }
  func.func @transform_7(%arg0: i32) -> (i32, i32) {
    %c0_i32 = arith.constant 0 : i32
    %c0_i32_0 = arith.constant 0 : i32
    %c0_i32_1 = arith.constant 0 : i32
    return %c0_i32, %c0_i32_0 : i32, i32
  }
  func.func @transform_8(%arg0: i32) -> (i32, i32, i32) {
    %c0_i32 = arith.constant 0 : i32
    %c0_i32_0 = arith.constant 0 : i32
    %c0_i32_1 = arith.constant 0 : i32
    return %arg0, %c0_i32, %c0_i32_0 : i32, i32, i32
  }
}

</mosaic_0001>

<llo_original>
// kernel: tpu_custom_call.1
$region0: #{tpu_custom_call.1}
  #allocation0 [shape = 'u32[]', space=smem, size = 0x4, offset = 0x4, fixed_abs, tag = 'smem constant byte address 0x4 - core index']
  #allocation1 [shape = 'u32[144,128]{1,0:T(1,128)}', space=vmem, size = 0x12000, scoped, tag = 'internal scratch']
  #allocation2 [shape = 'bf16[8,32]{1,0:T(8,128)(2,1)}', space=vmem, size = 0x800, scoped, tag = 'scratch operand']
  %s0 = inlined_call_operand.hbm [shape: f32[2,8,32], index: 0, kind: input, shape index: {}]
  %s1 = inlined_call_operand.hbm [shape: f32[2,1,8], index: 1, kind: input, shape index: {}]
  %s2 = inlined_call_operand.hbm [shape: bf16[32,96], index: 2, kind: input, shape index: {}]
  %s3 = inlined_call_operand.hbm [shape: f32[1,96], index: 3, kind: input, shape index: {}]
  %s4 = inlined_call_operand.hbm [shape: bf16[32,32], index: 4, kind: input, shape index: {}]
  %s5 = inlined_call_operand.hbm [shape: f32[1,32], index: 5, kind: input, shape index: {}]
  %s6 = inlined_call_operand.hbm [shape: f32[1,32], index: 6, kind: input, shape index: {}]
  %s7 = inlined_call_operand.hbm [shape: f32[1,32], index: 7, kind: input, shape index: {}]
  %s8 = inlined_call_operand.hbm [shape: f32[2,8,32], index: 8, kind: output, shape index: {}]
  %s9 = sld [smem:[#allocation0]]
  $region97: #{tpu_custom_call.1} parent=0
    _
  %s11 = ssub.s32 1, %s9
  %s12 = scalar_select 0, %s11, %s9
  $region1: #{tpu_custom_call.1} parent=0
    #allocation3 [shape = 'u8[8192]{0}', space=vmem, size = 0x2000, scoped, tag = 'input window, operand 0']
    #allocation4 [shape = 's32[2]{0}', space=sflag, size = 0x8, scoped, tag = 'scoped memory for tpu_custom_call.1']
    #allocation5 [shape = 's32[2]{0}', space=sflag, size = 0x8, scoped, tag = 'scoped memory for tpu_custom_call.1']
    #allocation6 [shape = 'u8[1024]{0}', space=vmem, size = 0x400, scoped, tag = 'input window, operand 1']
    #allocation7 [shape = 's32[2]{0}', space=sflag, size = 0x8, scoped, tag = 'scoped memory for tpu_custom_call.1']
    #allocation8 [shape = 'u8[8192]{0}', space=vmem, size = 0x2000, scoped, tag = 'input window, operand 2, single buffered']
    #allocation9 [shape = 'u8[512]{0}', space=vmem, size = 0x400, scoped, tag = 'input window, operand 3, single buffered']
    #allocation10 [shape = 's32[1]{0}', space=sflag, size = 0x4, scoped, tag = 'scoped memory for tpu_custom_call.1']
    #allocation11 [shape = 'u8[8192]{0}', space=vmem, size = 0x2000, scoped, tag = 'input window, operand 4, single buffered']
    #allocation12 [shape = 'u8[512]{0}', space=vmem, size = 0x400, scoped, tag = 'input window, operand 5, single buffered']
    #allocation13 [shape = 's32[1]{0}', space=sflag, size = 0x4, scoped, tag = 'scoped memory for tpu_custom_call.1']
    #allocation14 [shape = 'u8[512]{0}', space=vmem, size = 0x400, scoped, tag = 'input window, operand 6, single buffered']
    #allocation15 [shape = 'u8[512]{0}', space=vmem, size = 0x400, scoped, tag = 'input window, operand 7, single buffered']
    #allocation16 [shape = 's32[1]{0}', space=sflag, size = 0x4, scoped, tag = 'scoped memory for tpu_custom_call.1']
    #allocation17 [shape = 'u8[8192]{0}', space=vmem, size = 0x2000, scoped, tag = 'output window, operand 0']
    %13 = vsyncpa [#allocation4], 0
    %s14 = scalar_lea.sflag [#allocation4], 1
    %15 = vsyncpa %s14, 0
    %16 = vsyncpa [#allocation7], 0
    %s17 = scalar_lea.sflag [#allocation7], 1
    %18 = vsyncpa %s17, 0
    %19 = vsyncpa [#allocation10], 0
    %20 = vsyncpa [#allocation13], 0
    %21 = vsyncpa [#allocation16], 0
    %22 = vsyncpa [#allocation5], 0
    %s23 = scalar_lea.sflag [#allocation5], 1
    %24 = vsyncpa %s23, 0
    loop: start=0, step=1, limit=4
    $region2: #{tpu_custom_call.1} parent=1 // loop_pre_header
      _
    $region3: #{tpu_custom_call.1} parent=1 // loop_header
      %s26 = sphi 0, %s30
      %p27 = scmp.ge.s32.totalorder %s26, 4
      %s36 = sphi 0, %s38
      %s39 = sphi 0, %s36
      %s40 = sphi 0, %s39
      %s56 = sphi 0, %s40
      %s62 = sphi 0, %s64
      %s65 = sphi 0, %s62
      %s66 = sphi 0, %s65
      %s82 = sphi 0, %s66
      %s86 = sphi 0, %s86
      %s88 = sphi 0, %s86
      %s89 = sphi 0, %s88
      %s103 = sphi 0, %s89
      %s107 = sphi 0, %s107
      %s109 = sphi 0, %s107
      %s110 = sphi 0, %s109
      %s124 = sphi 0, %s110
      %s128 = sphi 0, %s128
      %s130 = sphi 0, %s128
      %s131 = sphi 0, %s130
      %s145 = sphi 0, %s131
      %s149 = sphi 0, %s149
      %s151 = sphi 0, %s149
      %s152 = sphi 0, %s151
      %s166 = sphi 0, %s152
      %s170 = sphi 0, %s170
      %s172 = sphi 0, %s170
      %s173 = sphi 0, %s172
      %s187 = sphi 0, %s173
      %s191 = sphi 0, %s191
      %s193 = sphi 0, %s191
      %s194 = sphi 0, %s193
      %s208 = sphi 0, %s194
      %s214 = sphi 0, %s216
      %s217 = sphi 0, %s214
      %s218 = sphi 0, %s217
      %s234 = sphi 0, %s218
    $region4: #{tpu_custom_call.1} parent=1 // loop_header_branch
      %29 = sbr.rel (%p27) target = $region8
    $region5: #{tpu_custom_call.1} parent=1 // loop_body
      %s31 = ssub.s32 %s26, 1
      %s32 = ssub.s32 %s26, 2
      %s33 = sadd.s32 %s26, 1
      %s34 = ssub.s32 %s26, %s33
      %p35 = scmp.eq.s32.totalorder %s34, 0
      %s37 = sadd.s32 %s36, 1
      %s38 = scalar_select %p35, %s36, %s37
      %p41 = pneg %p35
      %p42 = scmp.eq.s32.totalorder %s26, 1
      %p43 = por %p41, %p42
      %p44 = scmp.ne.s32.totalorder %s36, %s39
      %p45 = scmp.eq.s32.totalorder %s26, 0
      %p46 = por %p44, %p45
      %p47 = scmp.ne.s32.totalorder %s36, %s39
      %p48 = scmp.eq.s32.totalorder %s31, 1
      %p49 = por %p47, %p48
      %p50 = scmp.ne.s32.totalorder %s39, %s40
      %p51 = scmp.eq.s32.totalorder %s31, 0
      %p52 = por %p50, %p51
      %p53 = scmp.ne.s32.totalorder %s39, %s40
      %p54 = scmp.eq.s32.totalorder %s32, 1
      %p55 = por %p53, %p54
      %p57 = scmp.ne.s32.totalorder %s40, %s56
      %p58 = scmp.eq.s32.totalorder %s32, 0
      %p59 = por %p57, %p58
      %s60 = ssub.s32 %s26, %s33
      %p61 = scmp.eq.s32.totalorder %s60, 0
      %s63 = sadd.s32 %s62, 1
      %s64 = scalar_select %p61, %s62, %s63
      %p67 = pneg %p61
      %p68 = scmp.eq.s32.totalorder %s26, 1
      %p69 = por %p67, %p68
      %p70 = scmp.ne.s32.totalorder %s62, %s65
      %p71 = scmp.eq.s32.totalorder %s26, 0
      %p72 = por %p70, %p71
      %p73 = scmp.ne.s32.totalorder %s62, %s65
      %p74 = scmp.eq.s32.totalorder %s31, 1
      %p75 = por %p73, %p74
      %p76 = scmp.ne.s32.totalorder %s65, %s66
      %p77 = scmp.eq.s32.totalorder %s31, 0
      %p78 = por %p76, %p77
      %p79 = scmp.ne.s32.totalorder %s65, %s66
      %p80 = scmp.eq.s32.totalorder %s32, 1
      %p81 = por %p79, %p80
      %p83 = scmp.ne.s32.totalorder %s66, %s82
      %p84 = scmp.eq.s32.totalorder %s32, 0
      %p85 = por %p83, %p84
      %s87 = sadd.s32 %s86, 1
      %p90 = scmp.eq.s32.totalorder %s26, 1
      %p91 = scmp.ne.s32.totalorder %s86, %s88
      %p92 = scmp.eq.s32.totalorder %s26, 0
      %p93 = por %p91, %p92
      %p94 = scmp.ne.s32.totalorder %s86, %s88
      %p95 = scmp.eq.s32.totalorder %s31, 1
      %p96 = por %p94, %p95
      %p97 = scmp.ne.s32.totalorder %s88, %s89
      %p98 = scmp.eq.s32.totalorder %s31, 0
      %p99 = por %p97, %p98
      %p100 = scmp.ne.s32.totalorder %s88, %s89
      %p101 = scmp.eq.s32.totalorder %s32, 1
      %p102 = por %p100, %p101
      %p104 = scmp.ne.s32.totalorder %s89, %s103
      %p105 = scmp.eq.s32.totalorder %s32, 0
      %p106 = por %p104, %p105
      %s108 = sadd.s32 %s107, 1
      %p111 = scmp.eq.s32.totalorder %s26, 1
      %p112 = scmp.ne.s32.totalorder %s107, %s109
      %p113 = scmp.eq.s32.totalorder %s26, 0
      %p114 = por %p112, %p113
      %p115 = scmp.ne.s32.totalorder %s107, %s109
      %p116 = scmp.eq.s32.totalorder %s31, 1
      %p117 = por %p115, %p116
      %p118 = scmp.ne.s32.totalorder %s109, %s110
      %p119 = scmp.eq.s32.totalorder %s31, 0
      %p120 = por %p118, %p119
      %p121 = scmp.ne.s32.totalorder %s109, %s110
      %p122 = scmp.eq.s32.totalorder %s32, 1
      %p123 = por %p121, %p122
      %p125 = scmp.ne.s32.totalorder %s110, %s124
      %p126 = scmp.eq.s32.totalorder %s32, 0
      %p127 = por %p125, %p126
      %s129 = sadd.s32 %s128, 1
      %p132 = scmp.eq.s32.totalorder %s26, 1
      %p133 = scmp.ne.s32.totalorder %s128, %s130
      %p134 = scmp.eq.s32.totalorder %s26, 0
      %p135 = por %p133, %p134
      %p136 = scmp.ne.s32.totalorder %s128, %s130
      %p137 = scmp.eq.s32.totalorder %s31, 1
      %p138 = por %p136, %p137
      %p139 = scmp.ne.s32.totalorder %s130, %s131
      %p140 = scmp.eq.s32.totalorder %s31, 0
      %p141 = por %p139, %p140
      %p142 = scmp.ne.s32.totalorder %s130, %s131
      %p143 = scmp.eq.s32.totalorder %s32, 1
      %p144 = por %p142, %p143
      %p146 = scmp.ne.s32.totalorder %s131, %s145
      %p147 = scmp.eq.s32.totalorder %s32, 0
      %p148 = por %p146, %p147
      %s150 = sadd.s32 %s149, 1
      %p153 = scmp.eq.s32.totalorder %s26, 1
      %p154 = scmp.ne.s32.totalorder %s149, %s151
      %p155 = scmp.eq.s32.totalorder %s26, 0
      %p156 = por %p154, %p155
      %p157 = scmp.ne.s32.totalorder %s149, %s151
      %p158 = scmp.eq.s32.totalorder %s31, 1
      %p159 = por %p157, %p158
      %p160 = scmp.ne.s32.totalorder %s151, %s152
      %p161 = scmp.eq.s32.totalorder %s31, 0
      %p162 = por %p160, %p161
      %p163 = scmp.ne.s32.totalorder %s151, %s152
      %p164 = scmp.eq.s32.totalorder %s32, 1
      %p165 = por %p163, %p164
      %p167 = scmp.ne.s32.totalorder %s152, %s166
      %p168 = scmp.eq.s32.totalorder %s32, 0
      %p169 = por %p167, %p168
      %s171 = sadd.s32 %s170, 1
      %p174 = scmp.eq.s32.totalorder %s26, 1
      %p175 = scmp.ne.s32.totalorder %s170, %s172
      %p176 = scmp.eq.s32.totalorder %s26, 0
      %p177 = por %p175, %p176
      %p178 = scmp.ne.s32.totalorder %s170, %s172
      %p179 = scmp.eq.s32.totalorder %s31, 1
      %p180 = por %p178, %p179
      %p181 = scmp.ne.s32.totalorder %s172, %s173
      %p182 = scmp.eq.s32.totalorder %s31, 0
      %p183 = por %p181, %p182
      %p184 = scmp.ne.s32.totalorder %s172, %s173
      %p185 = scmp.eq.s32.totalorder %s32, 1
      %p186 = por %p184, %p185
      %p188 = scmp.ne.s32.totalorder %s173, %s187
      %p189 = scmp.eq.s32.totalorder %s32, 0
      %p190 = por %p188, %p189
      %s192 = sadd.s32 %s191, 1
      %p195 = scmp.eq.s32.totalorder %s26, 1
      %p196 = scmp.ne.s32.totalorder %s191, %s193
      %p197 = scmp.eq.s32.totalorder %s26, 0
      %p198 = por %p196, %p197
      %p199 = scmp.ne.s32.totalorder %s191, %s193
      %p200 = scmp.eq.s32.totalorder %s31, 1
      %p201 = por %p199, %p200
      %p202 = scmp.ne.s32.totalorder %s193, %s194
      %p203 = scmp.eq.s32.totalorder %s31, 0
      %p204 = por %p202, %p203
      %p205 = scmp.ne.s32.totalorder %s193, %s194
      %p206 = scmp.eq.s32.totalorder %s32, 1
      %p207 = por %p205, %p206
      %p209 = scmp.ne.s32.totalorder %s194, %s208
      %p210 = scmp.eq.s32.totalorder %s32, 0
      %p211 = por %p209, %p210
      %s212 = ssub.s32 %s26, %s33
      %p213 = scmp.eq.s32.totalorder %s212, 0
      %s215 = sadd.s32 %s214, 1
      %s216 = scalar_select %p213, %s214, %s215
      %p219 = pneg %p213
      %p220 = scmp.eq.s32.totalorder %s26, 1
      %p221 = por %p219, %p220
      %p222 = scmp.ne.s32.totalorder %s214, %s217
      %p223 = scmp.eq.s32.totalorder %s26, 0
      %p224 = por %p222, %p223
      %p225 = scmp.ne.s32.totalorder %s214, %s217
      %p226 = scmp.eq.s32.totalorder %s31, 1
      %p227 = por %p225, %p226
      %p228 = scmp.ne.s32.totalorder %s217, %s218
      %p229 = scmp.eq.s32.totalorder %s31, 0
      %p230 = por %p228, %p229
      %p231 = scmp.ne.s32.totalorder %s217, %s218
      %p232 = scmp.eq.s32.totalorder %s32, 1
      %p233 = por %p231, %p232
      %p235 = scmp.ne.s32.totalorder %s218, %s234
      %p236 = scmp.eq.s32.totalorder %s32, 0
      %p237 = por %p235, %p236
      %p238 = scmp.le.s32.totalorder 1, %s26
      %p239 = scmp.lt.s32.totalorder %s26, 3
      %p240 = pnand %p238, %p239
      %p241 = pneg %p240
      // Predicated region
      $region9: #{tpu_custom_call.1} parent=5 // pred_check
        _
      $region10: #{tpu_custom_call.1} parent=5 // pred_check_branch
        %243 = sbr.rel (%p240) target = $region12
      $region11: #{tpu_custom_call.1} parent=5 // pred_region
        %s244 = ssub.s32 %s26, 1
        // Predicated region
        $region13: #{tpu_custom_call.1} parent=11 // pred_check
          %p245 = pneg %p99
        $region14: #{tpu_custom_call.1} parent=11 // pred_check_branch
          %247 = sbr.rel (%p245) target = $region16
        $region15: #{tpu_custom_call.1} parent=11 // pred_region
          %s249 = ssub.s32 256, 256
          %250 = vsyncadd [#allocation7], %s249
          %s251 = sshll.u32 [#allocation8], 4
          %s252 = int_to_ptr.vmem [resolvable:$true] %s251
          %257 = dma.hbm_to_vmem [thread:$0]  %s2, 256, %s252, [#allocation7], 64, 64, 4
        $region16: #{tpu_custom_call.1} parent=11 // pred_fallthru
          _
        // Predicated region
        $region17: #{tpu_custom_call.1} parent=11 // pred_check
          %p258 = pneg %p120
        $region18: #{tpu_custom_call.1} parent=11 // pred_check_branch
          %260 = sbr.rel (%p258) target = $region20
        $region19: #{tpu_custom_call.1} parent=11 // pred_region
          %s262 = ssub.s32 16, 16
          %263 = vsyncadd [#allocation10], %s262
          %s265 = sshll.u32 [#allocation9], 4
          %s266 = int_to_ptr.vmem [resolvable:$true] %s265
          %268 = dma.hbm_to_vmem [thread:$0]  %s3, 16, %s266, [#allocation10]
        $region20: #{tpu_custom_call.1} parent=11 // pred_fallthru
          _
        // Predicated region
        $region21: #{tpu_custom_call.1} parent=11 // pred_check
          %p269 = pneg %p141
        $region22: #{tpu_custom_call.1} parent=11 // pred_check_branch
          %271 = sbr.rel (%p269) target = $region24
        $region23: #{tpu_custom_call.1} parent=11 // pred_region
          %s273 = ssub.s32 256, 256
          %274 = vsyncadd [#allocation10], %s273
          %s275 = sshll.u32 [#allocation11], 4
          %s276 = int_to_ptr.vmem [resolvable:$true] %s275
          %281 = dma.hbm_to_vmem [thread:$0]  %s4, 256, %s276, [#allocation10], 64, 64, 4
        $region24: #{tpu_custom_call.1} parent=11 // pred_fallthru
          _
        // Predicated region
        $region25: #{tpu_custom_call.1} parent=11 // pred_check
          %p282 = pneg %p162
        $region26: #{tpu_custom_call.1} parent=11 // pred_check_branch
          %284 = sbr.rel (%p282) target = $region28
        $region27: #{tpu_custom_call.1} parent=11 // pred_region
          %s286 = ssub.s32 16, 16
          %287 = vsyncadd [#allocation13], %s286
          %s289 = sshll.u32 [#allocation12], 4
          %s290 = int_to_ptr.vmem [resolvable:$true] %s289
          %292 = dma.hbm_to_vmem [thread:$0]  %s5, 16, %s290, [#allocation13]
        $region28: #{tpu_custom_call.1} parent=11 // pred_fallthru
          _
        // Predicated region
        $region29: #{tpu_custom_call.1} parent=11 // pred_check
          %p293 = pneg %p183
        $region30: #{tpu_custom_call.1} parent=11 // pred_check_branch
          %295 = sbr.rel (%p293) target = $region32
        $region31: #{tpu_custom_call.1} parent=11 // pred_region
          %s297 = ssub.s32 16, 16
          %298 = vsyncadd [#allocation13], %s297
          %s300 = sshll.u32 [#allocation14], 4
          %s301 = int_to_ptr.vmem [resolvable:$true] %s300
          %303 = dma.hbm_to_vmem [thread:$0]  %s6, 16, %s301, [#allocation13]
        $region32: #{tpu_custom_call.1} parent=11 // pred_fallthru
          _
        // Predicated region
        $region33: #{tpu_custom_call.1} parent=11 // pred_check
          %p304 = pneg %p204
        $region34: #{tpu_custom_call.1} parent=11 // pred_check_branch
          %306 = sbr.rel (%p304) target = $region36
        $region35: #{tpu_custom_call.1} parent=11 // pred_region
          %s308 = ssub.s32 16, 16
          %309 = vsyncadd [#allocation16], %s308
          %s311 = sshll.u32 [#allocation15], 4
          %s312 = int_to_ptr.vmem [resolvable:$true] %s311
          %314 = dma.hbm_to_vmem [thread:$0]  %s7, 16, %s312, [#allocation16]
        $region36: #{tpu_custom_call.1} parent=11 // pred_fallthru
          _
      $region12: #{tpu_custom_call.1} parent=5 // pred_fallthru
        _
      %p315 = scmp.lt.s32.totalorder %s26, 2
      // Predicated region
      $region37: #{tpu_custom_call.1} parent=5 // pred_check
        %p316 = pneg %p315
      $region38: #{tpu_custom_call.1} parent=5 // pred_check_branch
        %318 = sbr.rel (%p316) target = $region40
      $region39: #{tpu_custom_call.1} parent=5 // pred_region
        // Predicated region
        $region41: #{tpu_custom_call.1} parent=39 // pred_check
          %p319 = pneg %p46
        $region42: #{tpu_custom_call.1} parent=39 // pred_check_branch
          %321 = sbr.rel (%p319) target = $region44
        $region43: #{tpu_custom_call.1} parent=39 // pred_region
          %s322 = sand.u32 %s36, 1
          %s323 = scalar_lea.sflag [#allocation4], %s322
          %s324 = sand.u32 %s36, 1
          %s325 = smul.addr %s324, 8
          %s326 = scalar_lea.vmem [#allocation3], %s325
          %s328 = ssub.s32 128, 128
          %329 = vsyncadd %s323, %s328
          %s330 = smul.addr %s26, 128
          %s331 = scalar_lea.hbm %s0, %s330
          %s333 = sshll.u32 %s326, 4
          %s334 = int_to_ptr.vmem [resolvable:$true] %s333
          %336 = dma.hbm_to_vmem [thread:$0]  %s331, 128, %s334, %s323
        $region44: #{tpu_custom_call.1} parent=39 // pred_fallthru
          _
        // Predicated region
        $region45: #{tpu_custom_call.1} parent=39 // pred_check
          %p337 = pneg %p72
        $region46: #{tpu_custom_call.1} parent=39 // pred_check_branch
          %339 = sbr.rel (%p337) target = $region48
        $region47: #{tpu_custom_call.1} parent=39 // pred_region
          %s340 = sand.u32 %s26, 1
          %s341 = scalar_lea.sflag [#allocation7], %s340
          %s342 = sand.u32 %s62, 1
          %s343 = scalar_lea.vmem [#allocation6], %s342
          %s345 = ssub.s32 16, 16
          %346 = vsyncadd %s341, %s345
          %s347 = smul.addr %s26, 16
          %s348 = scalar_lea.hbm %s1, %s347
          %s350 = sshll.u32 %s343, 4
          %s351 = int_to_ptr.vmem [resolvable:$true] %s350
          %353 = dma.hbm_to_vmem [thread:$0]  %s348, 16, %s351, %s341
        $region48: #{tpu_custom_call.1} parent=39 // pred_fallthru
          _
      $region40: #{tpu_custom_call.1} parent=5 // pred_fallthru
        _
      %p354 = scmp.le.s32.totalorder 1, %s26
      %p355 = scmp.lt.s32.totalorder %s26, 3
      %p356 = pnand %p354, %p355
      %p357 = pneg %p356
      // Predicated region
      $region49: #{tpu_custom_call.1} parent=5 // pred_check
        _
      $region50: #{tpu_custom_call.1} parent=5 // pred_check_branch
        %359 = sbr.rel (%p356) target = $region52
      $region51: #{tpu_custom_call.1} parent=5 // pred_region
        %s360 = ssub.s32 %s26, 1
        %s361 = sand.u32 %s39, 1
        %s362 = scalar_lea.sflag [#allocation4], %s361
        %s363 = sand.u32 %s39, 1
        %s364 = smul.addr %s363, 8
        %s365 = scalar_lea.vmem [#allocation3], %s364
        // Predicated region
        $region53: #{tpu_custom_call.1} parent=51 // pred_check
          %p366 = pneg %p52
        $region54: #{tpu_custom_call.1} parent=51 // pred_check_branch
          %368 = sbr.rel (%p366) target = $region56
        $region55: #{tpu_custom_call.1} parent=51 // pred_region
          %369 = dma.done %s362, 128
        $region56: #{tpu_custom_call.1} parent=51 // pred_fallthru
          _
        %s370 = sand.u32 %s31, 1
        %s371 = scalar_lea.sflag [#allocation7], %s370
        %s372 = sand.u32 %s65, 1
        %s373 = scalar_lea.vmem [#allocation6], %s372
        // Predicated region
        $region57: #{tpu_custom_call.1} parent=51 // pred_check
          %p374 = pneg %p78
        $region58: #{tpu_custom_call.1} parent=51 // pred_check_branch
          %376 = sbr.rel (%p374) target = $region60
        $region59: #{tpu_custom_call.1} parent=51 // pred_region
          %377 = dma.done %s371, 16
        $region60: #{tpu_custom_call.1} parent=51 // pred_fallthru
          _
        // Predicated region
        $region61: #{tpu_custom_call.1} parent=51 // pred_check
          %p378 = pneg %p99
        $region62: #{tpu_custom_call.1} parent=51 // pred_check_branch
          %380 = sbr.rel (%p378) target = $region64
        $region63: #{tpu_custom_call.1} parent=51 // pred_region
          %381 = dma.done [#allocation7], 256
        $region64: #{tpu_custom_call.1} parent=51 // pred_fallthru
          _
        // Predicated region
        $region65: #{tpu_custom_call.1} parent=51 // pred_check
          %p382 = pneg %p120
        $region66: #{tpu_custom_call.1} parent=51 // pred_check_branch
          %384 = sbr.rel (%p382) target = $region68
        $region67: #{tpu_custom_call.1} parent=51 // pred_region
          %385 = dma.done [#allocation10], 16
        $region68: #{tpu_custom_call.1} parent=51 // pred_fallthru
          _
        // Predicated region
        $region69: #{tpu_custom_call.1} parent=51 // pred_check
          %p386 = pneg %p141
        $region70: #{tpu_custom_call.1} parent=51 // pred_check_branch
          %388 = sbr.rel (%p386) target = $region72
        $region71: #{tpu_custom_call.1} parent=51 // pred_region
          %389 = dma.done [#allocation10], 256
        $region72: #{tpu_custom_call.1} parent=51 // pred_fallthru
          _
        // Predicated region
        $region73: #{tpu_custom_call.1} parent=51 // pred_check
          %p390 = pneg %p162
        $region74: #{tpu_custom_call.1} parent=51 // pred_check_branch
          %392 = sbr.rel (%p390) target = $region76
        $region75: #{tpu_custom_call.1} parent=51 // pred_region
          %393 = dma.done [#allocation13], 16
        $region76: #{tpu_custom_call.1} parent=51 // pred_fallthru
          _
        // Predicated region
        $region77: #{tpu_custom_call.1} parent=51 // pred_check
          %p394 = pneg %p183
        $region78: #{tpu_custom_call.1} parent=51 // pred_check_branch
          %396 = sbr.rel (%p394) target = $region80
        $region79: #{tpu_custom_call.1} parent=51 // pred_region
          %397 = dma.done [#allocation13], 16
        $region80: #{tpu_custom_call.1} parent=51 // pred_fallthru
          _
        // Predicated region
        $region81: #{tpu_custom_call.1} parent=51 // pred_check
          %p398 = pneg %p204
        $region82: #{tpu_custom_call.1} parent=51 // pred_check_branch
          %400 = sbr.rel (%p398) target = $region84
        $region83: #{tpu_custom_call.1} parent=51 // pred_region
          %401 = dma.done [#allocation16], 16
        $region84: #{tpu_custom_call.1} parent=51 // pred_fallthru
          _
        %s402 = sand.u32 %s39, 1
        %s403 = scalar_lea.sflag [#allocation4], %s402
        %s404 = sand.u32 %s39, 1
        %s405 = smul.addr %s404, 8
        %s406 = scalar_lea.vmem [#allocation3], %s405
        %p407 = pneg %p52
        %p408 = pneg %p49
        %s409 = sand.u32 %s31, 1
        %s410 = scalar_lea.sflag [#allocation7], %s409
        %s411 = sand.u32 %s65, 1
        %s412 = scalar_lea.vmem [#allocation6], %s411
        %p413 = pneg %p78
        %p414 = pneg %p75
        %p415 = pneg %p99
        %p416 = pneg %p96
        %p417 = pneg %p120
        %p418 = pneg %p117
        %p419 = pneg %p141
        %p420 = pneg %p138
        %p421 = pneg %p162
        %p422 = pneg %p159
        %p423 = pneg %p183
        %p424 = pneg %p180
        %p425 = pneg %p204
        %p426 = pneg %p201
        %p427 = pneg %p230
        %p428 = pneg %p227
        %s429 = sand.u32 %s217, 1
        %s430 = scalar_lea.sflag [#allocation5], %s429
        %s431 = sand.u32 %s217, 1
        %s432 = smul.addr %s431, 8
        %s433 = scalar_lea.vmem [#allocation17], %s432
        %v435 = vld [vmem:[%s365] sm:$0xff]
        %v436 = vpack.c.bf16 %v435, %v435
        %v437 = vld [vmem:[%s373] sm:$0x1]
        %v438 = vld [vmem:[#allocation8] sm:$0xf]
        %v439 = vld [vmem:[#allocation8 + $0x4] sm:$0xf]
        %v440 = vld [vmem:[#allocation8 + $0x8] sm:$0xf]
        %v441 = vld [vmem:[#allocation8 + $0xc] sm:$0xf]
        %v442 = vld [vmem:[#allocation9] sm:$0x1]
        %v444 = vlaneseq
        %v445 = vshrl.u32 %v444, 7
        %v446 = vsub.s32 0, %v445
        %v447 = vrot.slane %v442, %v446
        %v453 = vunpack.c.l.b16 %v438
        %v454 = vunpack.c.l.b16 %v439
        %v455 = vunpack.c.l.b16 %v440
        %v456 = vunpack.c.l.b16 %v441
        %v457 = vpack.c.b16 %v454, %v453
        %v458 = vpack.c.b16 %v456, %v455
        %vm461 = vcmask 261120
        %v463 = vsel %vm461, %v436, 0
        %465 = vmatprep.subr.bf16.mxu0 0
        %466 = vmatpush1.bf16.msra.mxu0 %v457
        %467 = vmatprep.subr.bf16.mxu0 0
        %468 = vmatpush1.bf16.msra.mxu0 %v458
        %469 = vmatprep.subr.bf16.mxu0 0
        %470 = vmatpush1.bf16.msra.mxu0 0
        %471 = vmatprep.subr.bf16.mxu0 0
        %472 = vmatpush1.bf16.msra.mxu0 0
        %473 = vmatprep.subr.bf16.mxu0 0
        %474 = vmatpush1.bf16.msra.mxu0 0
        %475 = vmatprep.subr.bf16.mxu0 0
        %476 = vmatpush1.bf16.msra.mxu0 0
        %477 = vmatprep.subr.bf16.mxu0 0
        %478 = vmatpush1.bf16.msra.mxu0 0
        %479 = vmatprep.subr.bf16.mxu0 0
        %480 = vmatpush1.bf16.msra.mxu0 0
        %481 = vmatprep.subr.bf16.mxu0 0
        %482 = vmatpush1.bf16.msra.mxu0 0
        %483 = vmatprep.subr.bf16.mxu0 0
        %484 = vmatpush1.bf16.msra.mxu0 0
        %485 = vmatprep.subr.bf16.mxu0 0
        %486 = vmatpush1.bf16.msra.mxu0 0
        %487 = vmatprep.subr.bf16.mxu0 0
        %488 = vmatpush1.bf16.msra.mxu0 0
        %489 = vmatprep.subr.bf16.mxu0 0
        %490 = vmatpush1.bf16.msra.mxu0 0
        %491 = vmatprep.subr.bf16.mxu0 0
        %492 = vmatpush1.bf16.msra.mxu0 0
        %493 = vmatprep.subr.bf16.mxu0 0
        %494 = vmatpush1.bf16.msra.mxu0 0
        %495 = vmatprep.subr.bf16.mxu0 0
        %496 = vmatpush1.bf16.msra.mxu0 0
        %497 = vmatprep.mubr.bf16.mxu0 0
        %498 = vmatmul.mubr.bf16.gmra.mrb[0].mxu0 %v463
        %v499 = vpop.f32.mrb[0].mxu0
        %v500 = vadd.f32 %v447, %v499
        %v501 = vpop.f32.mrb[0].mxu0
        %v502 = vpop.f32.mrb[0].mxu0
        %v503 = vpop.f32.mrb[0].mxu0
        %504 = vdwg.mxu0
        %v505 = vpack.c.bf16 %v500, %v500
        %v507 = vlaneseq
        %v508 = vshrl.u32 %v507, 7
        %v509 = vsub.s32 0, %v508
        %v510 = vrot.slane %v437, %v509
        %513 = vrot.lane.b32.xlu0 %v505, 96
        %v514 = vpop.permute.xlu0 %513
        %vm515 = vcmask 64512
        %v517 = vsel %vm515, %v505, 0
        %v520 = vsel %vm515, %v514, 0
        %522 = vmatprep.subr.bf16.mxu0 0
        %523 = vmatpush1.bf16.xpose.msra.mxu0 %v520
        %524 = vmatprep.subr.bf16.mxu0 0
        %525 = vmatpush1.bf16.xpose.msra.mxu0 0
        %526 = vmatprep.subr.bf16.mxu0 0
        %527 = vmatpush1.bf16.xpose.msra.mxu0 0
        %528 = vmatprep.subr.bf16.mxu0 0
        %529 = vmatpush1.bf16.xpose.msra.mxu0 0
        %530 = vmatprep.subr.bf16.mxu0 0
        %531 = vmatpush1.bf16.xpose.msra.mxu0 0
        %532 = vmatprep.subr.bf16.mxu0 0
        %533 = vmatpush1.bf16.xpose.msra.mxu0 0
        %534 = vmatprep.subr.bf16.mxu0 0
        %535 = vmatpush1.bf16.xpose.msra.mxu0 0
        %536 = vmatprep.subr.bf16.mxu0 0
        %537 = vmatpush1.bf16.xpose.msra.mxu0 0
        %538 = vmatprep.subr.bf16.mxu0 0
        %539 = vmatpush1.bf16.xpose.msra.mxu0 0
        %540 = vmatprep.subr.bf16.mxu0 0
        %541 = vmatpush1.bf16.xpose.msra.mxu0 0
        %542 = vmatprep.subr.bf16.mxu0 0
        %543 = vmatpush1.bf16.xpose.msra.mxu0 0
        %544 = vmatprep.subr.bf16.mxu0 0
        %545 = vmatpush1.bf16.xpose.msra.mxu0 0
        %546 = vmatprep.subr.bf16.mxu0 0
        %547 = vmatpush1.bf16.xpose.msra.mxu0 0
        %548 = vmatprep.subr.bf16.mxu0 0
        %549 = vmatpush1.bf16.xpose.msra.mxu0 0
        %550 = vmatprep.subr.bf16.mxu0 0
        %551 = vmatpush1.bf16.xpose.msra.mxu0 0
        %552 = vmatprep.subr.bf16.mxu0 0
        %553 = vmatpush1.bf16.xpose.msra.mxu0 0
        %554 = vmatprep.mubr.bf16.mxu0 0
        %555 = vmatmul.mubr.bf16.gmra.mrb[0].mxu0 %v517
        %v556 = vpop.f32.mrb[0].mxu0
        %v557 = vadd.f32 %v510, %v556
        %v558 = vpop.f32.mrb[0].mxu0
        %v559 = vpop.f32.mrb[0].mxu0
        %v560 = vpop.f32.mrb[0].mxu0
        %561 = vdwg.mxu0
        %v562 = vsel %vm515, %v557, -inf
        %563 = vmax.xlane.f32.xlu0 %v562
        %v564 = vpop.xlane.xlu0 %563
        %v565 = vsub.f32 %v557, %v564
        %v566 = vmul.f32 %v565, 1.442695
        %v567 = vpow.pop %v566
        %v568 = vsel %vm515, %v567, 0.0
        %569 = vadd.xlane.f32.xlu0 %v568
        %v570 = vpop.xlane.xlu0 %569
        %v571 = vrcp.pop %v570
        %v572 = vmul.f32 %v567, %v571
        %v573 = vpack.c.bf16 %v572, %v572
        %574 = vrot.lane.b32.xlu0 %v505, 64
        %v575 = vpop.permute.xlu0 %574
        %v577 = vsel %vm515, %v573, 0
        %vm579 = vcmask 1043456
        %v581 = vsel %vm579, %v575, 0
        %583 = vmatprep.subr.bf16.mxu0 0
        %584 = vmatpush1.bf16.msra.mxu0 %v581
        %585 = vmatprep.subr.bf16.mxu0 0
        %586 = vmatpush1.bf16.msra.mxu0 0
        %587 = vmatprep.subr.bf16.mxu0 0
        %588 = vmatpush1.bf16.msra.mxu0 0
        %589 = vmatprep.subr.bf16.mxu0 0
        %590 = vmatpush1.bf16.msra.mxu0 0
        %591 = vmatprep.subr.bf16.mxu0 0
        %592 = vmatpush1.bf16.msra.mxu0 0
        %593 = vmatprep.subr.bf16.mxu0 0
        %594 = vmatpush1.bf16.msra.mxu0 0
        %595 = vmatprep.subr.bf16.mxu0 0
        %596 = vmatpush1.bf16.msra.mxu0 0
        %597 = vmatprep.subr.bf16.mxu0 0
        %598 = vmatpush1.bf16.msra.mxu0 0
        %599 = vmatprep.subr.bf16.mxu0 0
        %600 = vmatpush1.bf16.msra.mxu0 0
        %601 = vmatprep.subr.bf16.mxu0 0
        %602 = vmatpush1.bf16.msra.mxu0 0
        %603 = vmatprep.subr.bf16.mxu0 0
        %604 = vmatpush1.bf16.msra.mxu0 0
        %605 = vmatprep.subr.bf16.mxu0 0
        %606 = vmatpush1.bf16.msra.mxu0 0
        %607 = vmatprep.subr.bf16.mxu0 0
        %608 = vmatpush1.bf16.msra.mxu0 0
        %609 = vmatprep.subr.bf16.mxu0 0
        %610 = vmatpush1.bf16.msra.mxu0 0
        %611 = vmatprep.subr.bf16.mxu0 0
        %612 = vmatpush1.bf16.msra.mxu0 0
        %613 = vmatprep.subr.bf16.mxu0 0
        %614 = vmatpush1.bf16.msra.mxu0 0
        %615 = vmatprep.mubr.bf16.mxu0 0
        %616 = vmatmul.mubr.bf16.gmra.mrb[0].mxu0 %v577
        %v617 = vpop.f32.mrb[0].mxu0
        %v618 = vadd.f32 0.0, %v617
        %v619 = vpop.f32.mrb[0].mxu0
        %v620 = vpop.f32.mrb[0].mxu0
        %v621 = vpop.f32.mrb[0].mxu0
        %622 = vdwg.mxu0
        %v623 = vpack.c.bf16 %v618, %v618
        %vm624 = vcmask 60416
        %625 = vst.msk [vmem:[#allocation2] sm:$0xf] %vm624, %v623
        %626 = vrot.lane.b32.xlu0 %v505, 120
        %v627 = vpop.permute.xlu0 %626
        %628 = vrot.lane.b32.xlu0 %v505, 88
        %v629 = vpop.permute.xlu0 %628
        %v631 = vsel %vm515, %v627, 0
        %v634 = vsel %vm515, %v629, 0
        %636 = vmatprep.subr.bf16.mxu0 0
        %637 = vmatpush1.bf16.xpose.msra.mxu0 %v634
        %638 = vmatprep.subr.bf16.mxu0 0
        %639 = vmatpush1.bf16.xpose.msra.mxu0 0
        %640 = vmatprep.subr.bf16.mxu0 0
        %641 = vmatpush1.bf16.xpose.msra.mxu0 0
        %642 = vmatprep.subr.bf16.mxu0 0
        %643 = vmatpush1.bf16.xpose.msra.mxu0 0
        %644 = vmatprep.subr.bf16.mxu0 0
        %645 = vmatpush1.bf16.xpose.msra.mxu0 0
        %646 = vmatprep.subr.bf16.mxu0 0
        %647 = vmatpush1.bf16.xpose.msra.mxu0 0
        %648 = vmatprep.subr.bf16.mxu0 0
        %649 = vmatpush1.bf16.xpose.msra.mxu0 0
        %650 = vmatprep.subr.bf16.mxu0 0
        %651 = vmatpush1.bf16.xpose.msra.mxu0 0
        %652 = vmatprep.subr.bf16.mxu0 0
        %653 = vmatpush1.bf16.xpose.msra.mxu0 0
        %654 = vmatprep.subr.bf16.mxu0 0
        %655 = vmatpush1.bf16.xpose.msra.mxu0 0
        %656 = vmatprep.subr.bf16.mxu0 0
        %657 = vmatpush1.bf16.xpose.msra.mxu0 0
        %658 = vmatprep.subr.bf16.mxu0 0
        %659 = vmatpush1.bf16.xpose.msra.mxu0 0
        %660 = vmatprep.subr.bf16.mxu0 0
        %661 = vmatpush1.bf16.xpose.msra.mxu0 0
        %662 = vmatprep.subr.bf16.mxu0 0
        %663 = vmatpush1.bf16.xpose.msra.mxu0 0
        %664 = vmatprep.subr.bf16.mxu0 0
        %665 = vmatpush1.bf16.xpose.msra.mxu0 0
        %666 = vmatprep.subr.bf16.mxu0 0
        %667 = vmatpush1.bf16.xpose.msra.mxu0 0
        %668 = vmatprep.mubr.bf16.mxu0 0
        %669 = vmatmul.mubr.bf16.gmra.mrb[0].mxu0 %v631
        %v670 = vpop.f32.mrb[0].mxu0
        %v671 = vadd.f32 %v510, %v670
        %v672 = vpop.f32.mrb[0].mxu0
        %v673 = vpop.f32.mrb[0].mxu0
        %v674 = vpop.f32.mrb[0].mxu0
        %675 = vdwg.mxu0
        %v676 = vsel %vm515, %v671, -inf
        %677 = vmax.xlane.f32.xlu0 %v676
        %v678 = vpop.xlane.xlu0 %677
        %v679 = vsub.f32 %v671, %v678
        %v680 = vmul.f32 %v679, 1.442695
        %v681 = vpow.pop %v680
        %v682 = vsel %vm515, %v681, 0.0
        %683 = vadd.xlane.f32.xlu0 %v682
        %v684 = vpop.xlane.xlu0 %683
        %v685 = vrcp.pop %v684
        %v686 = vmul.f32 %v681, %v685
        %v687 = vpack.c.bf16 %v686, %v686
        %688 = vrot.lane.b32.xlu0 %v505, 56
        %v689 = vpop.permute.xlu0 %688
        %v691 = vsel %vm515, %v687, 0
        %v694 = vsel %vm579, %v689, 0
        %696 = vmatprep.subr.bf16.mxu0 0
        %697 = vmatpush1.bf16.msra.mxu0 %v694
        %698 = vmatprep.subr.bf16.mxu0 0
        %699 = vmatpush1.bf16.msra.mxu0 0
        %700 = vmatprep.subr.bf16.mxu0 0
        %701 = vmatpush1.bf16.msra.mxu0 0
        %702 = vmatprep.subr.bf16.mxu0 0
        %703 = vmatpush1.bf16.msra.mxu0 0
        %704 = vmatprep.subr.bf16.mxu0 0
        %705 = vmatpush1.bf16.msra.mxu0 0
        %706 = vmatprep.subr.bf16.mxu0 0
        %707 = vmatpush1.bf16.msra.mxu0 0
        %708 = vmatprep.subr.bf16.mxu0 0
        %709 = vmatpush1.bf16.msra.mxu0 0
        %710 = vmatprep.subr.bf16.mxu0 0
        %711 = vmatpush1.bf16.msra.mxu0 0
        %712 = vmatprep.subr.bf16.mxu0 0
        %713 = vmatpush1.bf16.msra.mxu0 0
        %714 = vmatprep.subr.bf16.mxu0 0
        %715 = vmatpush1.bf16.msra.mxu0 0
        %716 = vmatprep.subr.bf16.mxu0 0
        %717 = vmatpush1.bf16.msra.mxu0 0
        %718 = vmatprep.subr.bf16.mxu0 0
        %719 = vmatpush1.bf16.msra.mxu0 0
        %720 = vmatprep.subr.bf16.mxu0 0
        %721 = vmatpush1.bf16.msra.mxu0 0
        %722 = vmatprep.subr.bf16.mxu0 0
        %723 = vmatpush1.bf16.msra.mxu0 0
        %724 = vmatprep.subr.bf16.mxu0 0
        %725 = vmatpush1.bf16.msra.mxu0 0
        %726 = vmatprep.subr.bf16.mxu0 0
        %727 = vmatpush1.bf16.msra.mxu0 0
        %728 = vmatprep.mubr.bf16.mxu0 0
        %729 = vmatmul.mubr.bf16.gmra.mrb[0].mxu0 %v691
        %v730 = vpop.f32.mrb[0].mxu0
        %v731 = vadd.f32 0.0, %v730
        %v732 = vpop.f32.mrb[0].mxu0
        %v733 = vpop.f32.mrb[0].mxu0
        %v734 = vpop.f32.mrb[0].mxu0
        %735 = vdwg.mxu0
        %v736 = vpack.c.bf16 %v731, %v731
        %v738 = vunpack.c.l.b16 %v736
        %v739 = vpack.c.b16 %v738, %v738
        %740 = vrot.lane.b32.xlu0 %v739, 8
        %v741 = vpop.permute.xlu0 %740
        %vm743 = vcmask 126016
        %744 = vst.msk [vmem:[#allocation2] sm:$0xf] %vm743, %v741
        %745 = vrot.lane.b32.xlu0 %v505, 112
        %v746 = vpop.permute.xlu0 %745
        %747 = vrot.lane.b32.xlu0 %v505, 80
        %v748 = vpop.permute.xlu0 %747
        %v750 = vsel %vm515, %v746, 0
        %v753 = vsel %vm515, %v748, 0
        %755 = vmatprep.subr.bf16.mxu0 0
        %756 = vmatpush1.bf16.xpose.msra.mxu0 %v753
        %757 = vmatprep.subr.bf16.mxu0 0
        %758 = vmatpush1.bf16.xpose.msra.mxu0 0
        %759 = vmatprep.subr.bf16.mxu0 0
        %760 = vmatpush1.bf16.xpose.msra.mxu0 0
        %761 = vmatprep.subr.bf16.mxu0 0
        %762 = vmatpush1.bf16.xpose.msra.mxu0 0
        %763 = vmatprep.subr.bf16.mxu0 0
        %764 = vmatpush1.bf16.xpose.msra.mxu0 0
        %765 = vmatprep.subr.bf16.mxu0 0
        %766 = vmatpush1.bf16.xpose.msra.mxu0 0
        %767 = vmatprep.subr.bf16.mxu0 0
        %768 = vmatpush1.bf16.xpose.msra.mxu0 0
        %769 = vmatprep.subr.bf16.mxu0 0
        %770 = vmatpush1.bf16.xpose.msra.mxu0 0
        %771 = vmatprep.subr.bf16.mxu0 0
        %772 = vmatpush1.bf16.xpose.msra.mxu0 0
        %773 = vmatprep.subr.bf16.mxu0 0
        %774 = vmatpush1.bf16.xpose.msra.mxu0 0
        %775 = vmatprep.subr.bf16.mxu0 0
        %776 = vmatpush1.bf16.xpose.msra.mxu0 0
        %777 = vmatprep.subr.bf16.mxu0 0
        %778 = vmatpush1.bf16.xpose.msra.mxu0 0
        %779 = vmatprep.subr.bf16.mxu0 0
        %780 = vmatpush1.bf16.xpose.msra.mxu0 0
        %781 = vmatprep.subr.bf16.mxu0 0
        %782 = vmatpush1.bf16.xpose.msra.mxu0 0
        %783 = vmatprep.subr.bf16.mxu0 0
        %784 = vmatpush1.bf16.xpose.msra.mxu0 0
        %785 = vmatprep.subr.bf16.mxu0 0
        %786 = vmatpush1.bf16.xpose.msra.mxu0 0
        %787 = vmatprep.mubr.bf16.mxu0 0
        %788 = vmatmul.mubr.bf16.gmra.mrb[0].mxu0 %v750
        %v789 = vpop.f32.mrb[0].mxu0
        %v790 = vadd.f32 %v510, %v789
        %v791 = vpop.f32.mrb[0].mxu0
        %v792 = vpop.f32.mrb[0].mxu0
        %v793 = vpop.f32.mrb[0].mxu0
        %794 = vdwg.mxu0
        %v795 = vsel %vm515, %v790, -inf
        %796 = vmax.xlane.f32.xlu0 %v795
        %v797 = vpop.xlane.xlu0 %796
        %v798 = vsub.f32 %v790, %v797
        %v799 = vmul.f32 %v798, 1.442695
        %v800 = vpow.pop %v799
        %v801 = vsel %vm515, %v800, 0.0
        %802 = vadd.xlane.f32.xlu0 %v801
        %v803 = vpop.xlane.xlu0 %802
        %v804 = vrcp.pop %v803
        %v805 = vmul.f32 %v800, %v804
        %v806 = vpack.c.bf16 %v805, %v805
        %807 = vrot.lane.b32.xlu0 %v505, 48
        %v808 = vpop.permute.xlu0 %807
        %v810 = vsel %vm515, %v806, 0
        %v813 = vsel %vm579, %v808, 0
        %815 = vmatprep.subr.bf16.mxu0 0
        %816 = vmatpush1.bf16.msra.mxu0 %v813
        %817 = vmatprep.subr.bf16.mxu0 0
        %818 = vmatpush1.bf16.msra.mxu0 0
        %819 = vmatprep.subr.bf16.mxu0 0
        %820 = vmatpush1.bf16.msra.mxu0 0
        %821 = vmatprep.subr.bf16.mxu0 0
        %822 = vmatpush1.bf16.msra.mxu0 0
        %823 = vmatprep.subr.bf16.mxu0 0
        %824 = vmatpush1.bf16.msra.mxu0 0
        %825 = vmatprep.subr.bf16.mxu0 0
        %826 = vmatpush1.bf16.msra.mxu0 0
        %827 = vmatprep.subr.bf16.mxu0 0
        %828 = vmatpush1.bf16.msra.mxu0 0
        %829 = vmatprep.subr.bf16.mxu0 0
        %830 = vmatpush1.bf16.msra.mxu0 0
        %831 = vmatprep.subr.bf16.mxu0 0
        %832 = vmatpush1.bf16.msra.mxu0 0
        %833 = vmatprep.subr.bf16.mxu0 0
        %834 = vmatpush1.bf16.msra.mxu0 0
        %835 = vmatprep.subr.bf16.mxu0 0
        %836 = vmatpush1.bf16.msra.mxu0 0
        %837 = vmatprep.subr.bf16.mxu0 0
        %838 = vmatpush1.bf16.msra.mxu0 0
        %839 = vmatprep.subr.bf16.mxu0 0
        %840 = vmatpush1.bf16.msra.mxu0 0
        %841 = vmatprep.subr.bf16.mxu0 0
        %842 = vmatpush1.bf16.msra.mxu0 0
        %843 = vmatprep.subr.bf16.mxu0 0
        %844 = vmatpush1.bf16.msra.mxu0 0
        %845 = vmatprep.subr.bf16.mxu0 0
        %846 = vmatpush1.bf16.msra.mxu0 0
        %847 = vmatprep.mubr.bf16.mxu0 0
        %848 = vmatmul.mubr.bf16.gmra.mrb[0].mxu0 %v810
        %v849 = vpop.f32.mrb[0].mxu0
        %v850 = vadd.f32 0.0, %v849
        %v851 = vpop.f32.mrb[0].mxu0
        %v852 = vpop.f32.mrb[0].mxu0
        %v853 = vpop.f32.mrb[0].mxu0
        %854 = vdwg.mxu0
        %v855 = vpack.c.bf16 %v850, %v850
        %v857 = vunpack.c.l.b16 %v855
        %v858 = vpack.c.b16 %v857, %v857
        %859 = vrot.lane.b32.xlu0 %v858, 16
        %v860 = vpop.permute.xlu0 %859
        %vm862 = vcmask 191616
        %863 = vst.msk [vmem:[#allocation2] sm:$0xf] %vm862, %v860
        %864 = vrot.lane.b32.xlu0 %v505, 104
        %v865 = vpop.permute.xlu0 %864
        %866 = vrot.lane.b32.xlu0 %v505, 72
        %v867 = vpop.permute.xlu0 %866
        %v869 = vsel %vm515, %v865, 0
        %v872 = vsel %vm515, %v867, 0
        %874 = vmatprep.subr.bf16.mxu0 0
        %875 = vmatpush1.bf16.xpose.msra.mxu0 %v872
        %876 = vmatprep.subr.bf16.mxu0 0
        %877 = vmatpush1.bf16.xpose.msra.mxu0 0
        %878 = vmatprep.subr.bf16.mxu0 0
        %879 = vmatpush1.bf16.xpose.msra.mxu0 0
        %880 = vmatprep.subr.bf16.mxu0 0
        %881 = vmatpush1.bf16.xpose.msra.mxu0 0
        %882 = vmatprep.subr.bf16.mxu0 0
        %883 = vmatpush1.bf16.xpose.msra.mxu0 0
        %884 = vmatprep.subr.bf16.mxu0 0
        %885 = vmatpush1.bf16.xpose.msra.mxu0 0
        %886 = vmatprep.subr.bf16.mxu0 0
        %887 = vmatpush1.bf16.xpose.msra.mxu0 0
        %888 = vmatprep.subr.bf16.mxu0 0
        %889 = vmatpush1.bf16.xpose.msra.mxu0 0
        %890 = vmatprep.subr.bf16.mxu0 0
        %891 = vmatpush1.bf16.xpose.msra.mxu0 0
        %892 = vmatprep.subr.bf16.mxu0 0
        %893 = vmatpush1.bf16.xpose.msra.mxu0 0
        %894 = vmatprep.subr.bf16.mxu0 0
        %895 = vmatpush1.bf16.xpose.msra.mxu0 0
        %896 = vmatprep.subr.bf16.mxu0 0
        %897 = vmatpush1.bf16.xpose.msra.mxu0 0
        %898 = vmatprep.subr.bf16.mxu0 0
        %899 = vmatpush1.bf16.xpose.msra.mxu0 0
        %900 = vmatprep.subr.bf16.mxu0 0
        %901 = vmatpush1.bf16.xpose.msra.mxu0 0
        %902 = vmatprep.subr.bf16.mxu0 0
        %903 = vmatpush1.bf16.xpose.msra.mxu0 0
        %904 = vmatprep.subr.bf16.mxu0 0
        %905 = vmatpush1.bf16.xpose.msra.mxu0 0
        %906 = vmatprep.mubr.bf16.mxu0 0
        %907 = vmatmul.mubr.bf16.gmra.mrb[0].mxu0 %v869
        %v908 = vpop.f32.mrb[0].mxu0
        %v909 = vadd.f32 %v510, %v908
        %v910 = vpop.f32.mrb[0].mxu0
        %v911 = vpop.f32.mrb[0].mxu0
        %v912 = vpop.f32.mrb[0].mxu0
        %913 = vdwg.mxu0
        %v914 = vsel %vm515, %v909, -inf
        %915 = vmax.xlane.f32.xlu0 %v914
        %v916 = vpop.xlane.xlu0 %915
        %v917 = vsub.f32 %v909, %v916
        %v918 = vmul.f32 %v917, 1.442695
        %v919 = vpow.pop %v918
        %v920 = vsel %vm515, %v919, 0.0
        %921 = vadd.xlane.f32.xlu0 %v920
        %v922 = vpop.xlane.xlu0 %921
        %v923 = vrcp.pop %v922
        %v924 = vmul.f32 %v919, %v923
        %v925 = vpack.c.bf16 %v924, %v924
        %926 = vrot.lane.b32.xlu0 %v505, 40
        %v927 = vpop.permute.xlu0 %926
        %v929 = vsel %vm515, %v925, 0
        %v932 = vsel %vm579, %v927, 0
        %934 = vmatprep.subr.bf16.mxu0 0
        %935 = vmatpush1.bf16.msra.mxu0 %v932
        %936 = vmatprep.subr.bf16.mxu0 0
        %937 = vmatpush1.bf16.msra.mxu0 0
        %938 = vmatprep.subr.bf16.mxu0 0
        %939 = vmatpush1.bf16.msra.mxu0 0
        %940 = vmatprep.subr.bf16.mxu0 0
        %941 = vmatpush1.bf16.msra.mxu0 0
        %942 = vmatprep.subr.bf16.mxu0 0
        %943 = vmatpush1.bf16.msra.mxu0 0
        %944 = vmatprep.subr.bf16.mxu0 0
        %945 = vmatpush1.bf16.msra.mxu0 0
        %946 = vmatprep.subr.bf16.mxu0 0
        %947 = vmatpush1.bf16.msra.mxu0 0
        %948 = vmatprep.subr.bf16.mxu0 0
        %949 = vmatpush1.bf16.msra.mxu0 0
        %950 = vmatprep.subr.bf16.mxu0 0
        %951 = vmatpush1.bf16.msra.mxu0 0
        %952 = vmatprep.subr.bf16.mxu0 0
        %953 = vmatpush1.bf16.msra.mxu0 0
        %954 = vmatprep.subr.bf16.mxu0 0
        %955 = vmatpush1.bf16.msra.mxu0 0
        %956 = vmatprep.subr.bf16.mxu0 0
        %957 = vmatpush1.bf16.msra.mxu0 0
        %958 = vmatprep.subr.bf16.mxu0 0
        %959 = vmatpush1.bf16.msra.mxu0 0
        %960 = vmatprep.subr.bf16.mxu0 0
        %961 = vmatpush1.bf16.msra.mxu0 0
        %962 = vmatprep.subr.bf16.mxu0 0
        %963 = vmatpush1.bf16.msra.mxu0 0
        %964 = vmatprep.subr.bf16.mxu0 0
        %965 = vmatpush1.bf16.msra.mxu0 0
        %966 = vmatprep.mubr.bf16.mxu0 0
        %967 = vmatmul.mubr.bf16.gmra.mrb[0].mxu0 %v929
        %v968 = vpop.f32.mrb[0].mxu0
        %v969 = vadd.f32 0.0, %v968
        %v970 = vpop.f32.mrb[0].mxu0
        %v971 = vpop.f32.mrb[0].mxu0
        %v972 = vpop.f32.mrb[0].mxu0
        %973 = vdwg.mxu0
        %v974 = vpack.c.bf16 %v969, %v969
        %v976 = vunpack.c.l.b16 %v974
        %v977 = vpack.c.b16 %v976, %v976
        %978 = vrot.lane.b32.xlu0 %v977, 24
        %v979 = vpop.permute.xlu0 %978
        %vm981 = vcmask 257216
        %982 = vst.msk [vmem:[#allocation2] sm:$0xf] %vm981, %v979
        %v983 = vld [vmem:[#allocation2] sm:$0xf]
        %v984 = vld [vmem:[#allocation11] sm:$0xf]
        %v985 = vld [vmem:[#allocation11 + $0x4] sm:$0xf]
        %v986 = vld [vmem:[#allocation11 + $0x8] sm:$0xf]
        %v987 = vld [vmem:[#allocation11 + $0xc] sm:$0xf]
        %v988 = vld [vmem:[#allocation12] sm:$0x1]
        %v990 = vlaneseq
        %v991 = vshrl.u32 %v990, 7
        %v992 = vsub.s32 0, %v991
        %v993 = vrot.slane %v988, %v992
        %v999 = vunpack.c.l.b16 %v984
        %v1000 = vunpack.c.l.b16 %v985
        %v1001 = vunpack.c.l.b16 %v986
        %v1002 = vunpack.c.l.b16 %v987
        %v1003 = vpack.c.b16 %v1000, %v999
        %v1004 = vpack.c.b16 %v1002, %v1001
        %v1008 = vsel %vm461, %v983, 0
        %1010 = vmatprep.subr.bf16.mxu0 0
        %1011 = vmatpush1.bf16.msra.mxu0 %v1003
        %1012 = vmatprep.subr.bf16.mxu0 0
        %1013 = vmatpush1.bf16.msra.mxu0 %v1004
        %1014 = vmatprep.subr.bf16.mxu0 0
        %1015 = vmatpush1.bf16.msra.mxu0 0
        %1016 = vmatprep.subr.bf16.mxu0 0
        %1017 = vmatpush1.bf16.msra.mxu0 0
        %1018 = vmatprep.subr.bf16.mxu0 0
        %1019 = vmatpush1.bf16.msra.mxu0 0
        %1020 = vmatprep.subr.bf16.mxu0 0
        %1021 = vmatpush1.bf16.msra.mxu0 0
        %1022 = vmatprep.subr.bf16.mxu0 0
        %1023 = vmatpush1.bf16.msra.mxu0 0
        %1024 = vmatprep.subr.bf16.mxu0 0
        %1025 = vmatpush1.bf16.msra.mxu0 0
        %1026 = vmatprep.subr.bf16.mxu0 0
        %1027 = vmatpush1.bf16.msra.mxu0 0
        %1028 = vmatprep.subr.bf16.mxu0 0
        %1029 = vmatpush1.bf16.msra.mxu0 0
        %1030 = vmatprep.subr.bf16.mxu0 0
        %1031 = vmatpush1.bf16.msra.mxu0 0
        %1032 = vmatprep.subr.bf16.mxu0 0
        %1033 = vmatpush1.bf16.msra.mxu0 0
        %1034 = vmatprep.subr.bf16.mxu0 0
        %1035 = vmatpush1.bf16.msra.mxu0 0
        %1036 = vmatprep.subr.bf16.mxu0 0
        %1037 = vmatpush1.bf16.msra.mxu0 0
        %1038 = vmatprep.subr.bf16.mxu0 0
        %1039 = vmatpush1.bf16.msra.mxu0 0
        %1040 = vmatprep.subr.bf16.mxu0 0
        %1041 = vmatpush1.bf16.msra.mxu0 0
        %1042 = vmatprep.mubr.bf16.mxu0 0
        %1043 = vmatmul.mubr.bf16.gmra.mrb[0].mxu0 %v1008
        %v1044 = vpop.f32.mrb[0].mxu0
        %v1045 = vadd.f32 %v993, %v1044
        %v1046 = vpop.f32.mrb[0].mxu0
        %v1047 = vpop.f32.mrb[0].mxu0
        %v1048 = vpop.f32.mrb[0].mxu0
        %1049 = vdwg.mxu0
        %v1050 = vadd.f32 %v1045, %v435
        %v1051 = vsel %vm461, %v1050, 0.0
        %1052 = vadd.xlane.f32.xlu0 %v1051
        %v1053 = vpop.xlane.xlu0 %1052
        %v1054 = vrcp.pop 32.0
        %v1055 = vmul.f32 %v1053, %v1054
        %v1056 = vsub.f32 %v1050, %v1055
        %v1057 = vmul.f32 %v1056, %v1056
        %v1058 = vsel %vm461, %v1057, 0.0
        %1059 = vadd.xlane.f32.xlu0 %v1058
        %v1060 = vpop.xlane.xlu0 %1059
        %v1061 = vmul.f32 %v1060, %v1054
        %v1062 = vld [vmem:[#allocation14] sm:$0x1]
        %v1063 = vadd.f32 %v1061, 1e-12
        %v1064 = vrsqrt.pop %v1063
        %v1065 = vmul.f32 %v1056, %v1064
        %v1067 = vlaneseq
        %v1068 = vshrl.u32 %v1067, 7
        %v1069 = vsub.s32 0, %v1068
        %v1070 = vrot.slane %v1062, %v1069
        %v1072 = vmul.f32 %v1070, %v1065
        %v1073 = vld [vmem:[#allocation15] sm:$0x1]
        %v1075 = vlaneseq
        %v1076 = vshrl.u32 %v1075, 7
        %v1077 = vsub.s32 0, %v1076
        %v1078 = vrot.slane %v1073, %v1077
        %v1080 = vadd.f32 %v1072, %v1078
        %1081 = vst.msk [vmem:[%s433] sm:$0xff] %vm461, %v1080
        %s1082 = sand.u32 %s217, 1
        %s1083 = scalar_lea.sflag [#allocation5], %s1082
        %s1084 = sand.u32 %s217, 1
        %s1085 = smul.addr %s1084, 8
        %s1086 = scalar_lea.vmem [#allocation17], %s1085
        // Predicated region
        $region85: #{tpu_custom_call.1} parent=51 // pred_check
          %p1087 = pneg %p227
        $region86: #{tpu_custom_call.1} parent=51 // pred_check_branch
          %1089 = sbr.rel (%p1087) target = $region88
        $region87: #{tpu_custom_call.1} parent=51 // pred_region
          %s1091 = ssub.s32 128, 128
          %1092 = vsyncadd %s1083, %s1091
          %s1093 = smul.addr %s31, 128
          %s1094 = scalar_lea.hbm %s8, %s1093
          %s1096 = sshll.u32 %s1086, 4
          %s1097 = int_to_ptr.vmem [resolvable:$true] %s1096
          %1099 = dma.vmem_to_hbm [thread:$0]  %s1097, 128, %s1094, %s1083
        $region88: #{tpu_custom_call.1} parent=51 // pred_fallthru
          _
      $region52: #{tpu_custom_call.1} parent=5 // pred_fallthru
        _
      %p1100 = scmp.le.s32.totalorder 2, %s26
      // Predicated region
      $region89: #{tpu_custom_call.1} parent=5 // pred_check
        %p1101 = pneg %p1100
      $region90: #{tpu_custom_call.1} parent=5 // pred_check_branch
        %1103 = sbr.rel (%p1101) target = $region92
      $region91: #{tpu_custom_call.1} parent=5 // pred_region
        %s1104 = ssub.s32 %s26, 2
        // Predicated region
        $region93: #{tpu_custom_call.1} parent=91 // pred_check
          %p1105 = pneg %p233
        $region94: #{tpu_custom_call.1} parent=91 // pred_check_branch
          %1107 = sbr.rel (%p1105) target = $region96
        $region95: #{tpu_custom_call.1} parent=91 // pred_region
          %s1108 = sand.u32 %s218, 1
          %s1109 = scalar_lea.sflag [#allocation5], %s1108
          %s1110 = sand.u32 %s218, 1
          %s1111 = smul.addr %s1110, 8
          %s1112 = scalar_lea.vmem [#allocation17], %s1111
          %1113 = dma.done %s1109, 128
        $region96: #{tpu_custom_call.1} parent=91 // pred_fallthru
          _
      $region92: #{tpu_custom_call.1} parent=5 // pred_fallthru
        _
    $region6: #{tpu_custom_call.1} parent=1 // loop_footer
      %s30 = sadd.s32 1, %s26
    $region7: #{tpu_custom_call.1} parent=1 // loop_footer_branch
      %25 = sbr.rel target = $region3
    $region8: #{tpu_custom_call.1} parent=1 // loop_exit
      _
    %1114 = vsyncpa [#allocation4], 1
    %s1115 = scalar_lea.sflag [#allocation4], 1
    %1116 = vsyncpa %s1115, 1
    %1117 = vsyncpa [#allocation7], 1
    %s1118 = scalar_lea.sflag [#allocation7], 1
    %1119 = vsyncpa %s1118, 1
    %1120 = vsyncpa [#allocation10], 1
    %1121 = vsyncpa [#allocation13], 1
    %1122 = vsyncpa [#allocation16], 1
    %1123 = vsyncpa [#allocation5], 1
    %s1124 = scalar_lea.sflag [#allocation5], 1
    %1125 = vsyncpa %s1124, 1

</llo_original>
